<compile_context>
chip_gen: v7x
topology: tpu7x:2x2x1
jax: 0.10.0
libtpu: 0.0.40
codegen_flags: <defaults>
</compile_context>

<pallas_src>
import functools

import jax
import jax.numpy as jnp
from jax import lax
from jax.experimental import pallas as pl
from jax.experimental.pallas import tpu as pltpu


def _round_up(x, m):
    return ((x + m - 1) // m) * m


# ------------- tiled matmul + bias (MXU), direct-output accumulation ------------ #

def _matmul_bias_kernel(x_ref, w_ref, b_ref, o_ref):
    k = pl.program_id(2)

    @pl.when(k == 0)
    def _():
        # Initialize the resident output block with the broadcast bias: no f32
        # scratch accumulator and no epilogue copy (VMEM feedback, v7x).
        o_ref[...] = jnp.broadcast_to(b_ref[...], o_ref.shape)

    # Cast to bf16 inside the kernel (VPU has slack under the MXU) so the
    # wrapper never rewrites the operands in HBM; accumulate in f32 in o_ref.
    o_ref[...] += jnp.dot(x_ref[...].astype(jnp.bfloat16),
                          w_ref[...].astype(jnp.bfloat16),
                          preferred_element_type=jnp.float32)


def pallas_matmul_bias(x, w, b, *, tm_max=256, tk_max=512, tn_max=256):
    """out = x @ w + b (f32 output, bf16 MXU inputs cast in-kernel).

    Grid = (M blocks "parallel", C blocks "parallel", K blocks "arbitrary").
    With the default tiles every double-buffered block set stays < 3 MiB, well
    inside v5e's 16 MiB scoped-VMEM default and v7x's 64 MiB physical VMEM.
    """
    m, k = x.shape
    c = w.shape[1]

    m_al = _round_up(m, 16)     # bf16 packs 16 sublanes per vreg
    k_al = _round_up(k, 128)    # lane-aligned contraction tile (no ragged K)
    c_al = _round_up(c, 128)    # lane-dense output (unmasked stores)

    tm = min(tm_max, m_al)
    if m_al > 128:
        # Ensure >= 2 row steps so both v7x TensorCores get work.
        tm = min(tm, max(128, _round_up(m_al // 2, 128)))
    tk = min(tk_max, k_al)
    tn = min(tn_max, c_al)

    m_pad = _round_up(m_al, tm)
    k_pad = _round_up(k_al, tk)
    c_pad = _round_up(c_al, tn)

    x_p = x.astype(jnp.float32)
    w_p = w.astype(jnp.float32)
    b_p = b.reshape(1, c).astype(jnp.float32)
    if (m_pad, k_pad) != (m, k):
        x_p = jnp.pad(x_p, ((0, m_pad - m), (0, k_pad - k)))
    if (k_pad, c_pad) != (k, c):
        w_p = jnp.pad(w_p, ((0, k_pad - k), (0, c_pad - c)))
    if c_pad != c:
        b_p = jnp.pad(b_p, ((0, 0), (0, c_pad - c)))

    out = pl.pallas_call(
        _matmul_bias_kernel,
        out_shape=jax.ShapeDtypeStruct((m_pad, c_pad), jnp.float32),
        grid=(m_pad // tm, c_pad // tn, k_pad // tk),
        in_specs=[
            pl.BlockSpec((tm, tk), lambda i, j, kk: (i, kk)),
            pl.BlockSpec((tk, tn), lambda i, j, kk: (kk, j)),
            pl.BlockSpec((1, tn), lambda i, j, kk: (0, j)),
        ],
        out_specs=pl.BlockSpec((tm, tn), lambda i, j, kk: (i, j)),
        compiler_params=pltpu.CompilerParams(
            dimension_semantics=("parallel", "parallel", "arbitrary")),
    )(x_p, w_p, b_p)
    return out[:m, :c]


# --------------------- CSR-style segment-sum aggregation kernel ----------------- #

def _segment_agg_kernel(row_off_ref, dst_ref, coeff_ref, h_ref, out_ref, *,
                        block_rows):
    base = pl.program_id(0) * block_rows
    d = out_ref.shape[1]
    for r in range(block_rows):                      # static unroll over the row block
        start = row_off_ref[base + r]
        end = row_off_ref[base + r + 1]

        def body(e, acc):
            # Gather one h row by its (SMEM) destination index, scale, accumulate.
            return acc + coeff_ref[e] * h_ref[pl.ds(dst_ref[e], 1), :]

        out_ref[pl.ds(r, 1), :] = lax.fori_loop(
            start, end, body, jnp.zeros((1, d), jnp.float32))


def pallas_segment_aggregate(row_off, dst, coeff, h_all, *, block_rows=16):
    """out[r, :] = sum over edges e of row r of coeff[e] * h_all[dst[e], :].

    Edges must be sorted by row; `row_off` has n_rows + 1 entries giving each
    (padded) row's [start, end) edge range.  Index / coefficient arrays live in
    SMEM, h_all stays resident in VMEM and is gathered by dynamic sublane index,
    so the aggregation is O(E * D) instead of the dense O(N^2 * D) path.
    """
    # TODO(synk): for graphs where h_all (or the edge arrays) no longer fit in
    # VMEM/SMEM, page them in with manual make_async_copy double-buffering.
    n_rows = row_off.shape[0] - 1
    assert n_rows % block_rows == 0
    d_pad = h_all.shape[1]
    return pl.pallas_call(
        functools.partial(_segment_agg_kernel, block_rows=block_rows),
        out_shape=jax.ShapeDtypeStruct((n_rows, d_pad), jnp.float32),
        grid=(n_rows // block_rows,),
        in_specs=[
            pl.BlockSpec(memory_space=pltpu.MemorySpace.SMEM),   # row offsets
            pl.BlockSpec(memory_space=pltpu.MemorySpace.SMEM),   # dst indices
            pl.BlockSpec(memory_space=pltpu.MemorySpace.SMEM),   # coefficients
            pl.BlockSpec(h_all.shape, lambda i: (0, 0)),         # h resident in VMEM
        ],
        out_specs=pl.BlockSpec((block_rows, d_pad), lambda i: (i, 0)),
        compiler_params=pltpu.CompilerParams(
            dimension_semantics=("parallel",)),
    )(row_off, dst, coeff, h_all)


# ----------------------------- parameters / wrapper ----------------------------- #

def xavier_normal(key, shape):
    if len(shape) == 2:
        fan_in, fan_out = shape[1], shape[0]
    else:
        rf = 1
        for s in shape[2:]:
            rf *= s
        fan_in, fan_out = shape[1] * rf, shape[0] * rf
    std = (2.0 / (fan_in + fan_out)) ** 0.5
    return std * jax.random.normal(key, shape, dtype=jnp.float32)


def init_params(key, dim_in, dim_out, num_relations=2):
    ks = jax.random.split(key, 8)
    return {
        "bias": xavier_normal(ks[0], (1, dim_out)),
        "basis": xavier_normal(ks[1], (num_relations, dim_in, dim_out)),
        "att": xavier_normal(ks[2], (num_relations, num_relations)),
        "mapping_func": xavier_normal(ks[3], (1, dim_out * 2)),
        # HGNN_conv (TDHNN) parameters: theta + bias for each of the two convs.
        # TODO(synk): full HGNN_conv (dynamic hypergraph construction with
        # num_edges / up_bound / low_bound / k_n / k_e) has no source provided;
        # only its linear transform (x @ theta + bias) is implemented here.
        "hconv1_theta": xavier_normal(ks[4], (dim_out, dim_out)),
        "hconv1_bias": jnp.zeros((dim_out,), jnp.float32),
        "hconv2_theta": xavier_normal(ks[5], (dim_out, dim_out)),
        "hconv2_bias": jnp.zeros((dim_out,), jnp.float32),
    }


def _build_fused_weights(params):
    """Fold relation-basis linear + hconv linear + score projections into one W."""
    dim_out = params["bias"].shape[1]
    num_rel = params["att"].shape[0]
    basis = params["basis"]
    dim_in = basis.shape[1]

    # Wr = att @ basis
    wr = jnp.matmul(params["att"], basis.reshape(num_rel, -1))
    wr = wr.reshape(num_rel, dim_in, dim_out)

    # No nonlinearity between the two linears: (x@Wr)@theta + b == x@(Wr@theta) + b
    w_pos = wr[0] @ params["hconv1_theta"]
    w_neg = wr[1] @ params["hconv2_theta"]
    b_pos = params["hconv1_bias"]
    b_neg = params["hconv2_bias"]

    m1 = params["mapping_func"][0, :dim_out]
    m2 = params["mapping_func"][0, dim_out:]

    # per-node scalar score projections: h @ m == x @ (W @ m) + b @ m
    score_w = jnp.stack([w_pos @ m1, w_pos @ m2, w_neg @ m1, w_neg @ m2], axis=1)
    score_b = jnp.stack([jnp.dot(b_pos, m1), jnp.dot(b_pos, m2),
                         jnp.dot(b_neg, m1), jnp.dot(b_neg, m2)])

    w_all = jnp.concatenate([w_pos, w_neg, score_w], axis=1)     # (Din, 2*Dout+4)
    b_all = jnp.concatenate([b_pos, b_neg, score_b], axis=0)
    return w_all, b_all


def sp_merge_attention_forward(params, node_reps, adj_pos, adj_neg, *, alpha=0.2,
                               block_rows=16):
    """Pallas implementation of SpMergeAttentionLayer.forward (eval mode, AB='3')."""
    n = node_reps.shape[0]
    dim_out = params["bias"].shape[1]

    # dropout_node / dropout_att: identity in eval mode.

    # ---- one fused lane-dense MXU kernel: [h_pos | h_neg | score scalars]
    w_all, b_all = _build_fused_weights(params)
    fused = pallas_matmul_bias(node_reps, w_all, b_all)          # (N, 2*Dout+4) f32
    h_pos = fused[:, :dim_out]
    h_neg = fused[:, dim_out:2 * dim_out]
    sp1_pos = fused[:, 2 * dim_out + 0]
    sp2_pos = fused[:, 2 * dim_out + 1]
    sp1_neg = fused[:, 2 * dim_out + 2]
    sp2_neg = fused[:, 2 * dim_out + 3]

    # ---- per-edge raw attention score from per-node scalars (no E x D gathers).
    #      The elementwise score / sigmoid / degree-normalize math is left to
    #      XLA, which fuses it with these gathers (dedicated kernel removed).
    score_pos = sp1_pos[adj_pos[0]] + sp2_pos[adj_pos[1]]
    score_neg = sp1_neg[adj_neg[0]] + sp2_neg[adj_neg[1]]
    scores = jnp.concatenate([score_pos, score_neg], axis=0)     # (E,)

    adj_all = jnp.concatenate([adj_pos, adj_neg], axis=1)
    deg = jnp.zeros((n,), jnp.float32).at[adj_all[0]].add(1.0)
    sqrt_deg = jnp.sqrt(deg)
    sym_norm = sqrt_deg[adj_all[0]] * sqrt_deg[adj_all[1]]

    act = jnp.where(scores > 0, scores, alpha * scores)          # LeakyReLU(alpha)
    coeffs = jax.nn.sigmoid(act) / sym_norm                      # exact divide

    # ---- CSR-style O(E*D) aggregation (replaces the dense (N, 2N) adjacency):
    #      pos edges aggregate into rows [0, N); neg edges into rows [N, 2N).
    rows = jnp.concatenate([adj_pos[0], adj_neg[0] + n]).astype(jnp.int32)
    dsts = jnp.concatenate([adj_pos[1], adj_neg[1] + n]).astype(jnp.int32)
    order = jnp.argsort(rows)
    rows_s = rows[order]
    dsts_s = dsts[order]
    coeff_s = coeffs[order].astype(jnp.float32)

    n_rows_pad = _round_up(2 * n, block_rows)
    counts = jnp.zeros((n_rows_pad,), jnp.int32).at[rows_s].add(1)
    row_off = jnp.concatenate(
        [jnp.zeros((1,), jnp.int32), jnp.cumsum(counts, dtype=jnp.int32)])

    d_pad = _round_up(dim_out, 128)                              # lane-dense h / out
    h_rows = _round_up(2 * n, 8)
    h_all = jnp.zeros((h_rows, d_pad), jnp.float32)
    h_all = h_all.at[:n, :dim_out].set(h_pos).at[n:2 * n, :dim_out].set(h_neg)

    agg = pallas_segment_aggregate(row_off, dsts_s, coeff_s, h_all,
                                   block_rows=block_rows)
    h_agg_pos = agg[:n, :dim_out]
    h_agg_neg = agg[n:2 * n, :dim_out]

    # output = h_agg_pos - h_agg_neg + bias: cheap elementwise epilogue in XLA.
    output = h_agg_pos - h_agg_neg + params["bias"]
    return output, h_agg_pos, h_agg_neg


# ------------------------------------- main ------------------------------------- #

if __name__ == "__main__":
    N = 16          # number of nodes
    DIM_IN = 8
    DIM_OUT = 32
    NUM_POS = 32    # pos edges
    NUM_NEG = 32    # neg edges

    key = jax.random.PRNGKey(0)
    k_param, k_x, k_pd, k_nd = jax.random.split(key, 4)

    params = init_params(k_param, DIM_IN, DIM_OUT)
    node_reps = jax.random.normal(k_x, (N, DIM_IN), dtype=jnp.float32)

    # Every node appears as a source so the symmetric degree normalization is
    # well defined (the PyTorch reference would otherwise divide by zero too).
    src_pos = jnp.tile(jnp.arange(N, dtype=jnp.int32), NUM_POS // N)
    dst_pos = jax.random.randint(k_pd, (NUM_POS,), 0, N, dtype=jnp.int32)
    adj_pos = jnp.stack([src_pos, dst_pos], axis=0)              # (2, NUM_POS)

    src_neg = jnp.tile(jnp.arange(N, dtype=jnp.int32), NUM_NEG // N)
    dst_neg = jax.random.randint(k_nd, (NUM_NEG,), 0, N, dtype=jnp.int32)
    adj_neg = jnp.stack([src_neg, dst_neg], axis=0)              # (2, NUM_NEG)

    fwd = jax.jit(sp_merge_attention_forward)
    output, h_agg_pos, h_agg_neg = fwd(params, node_reps, adj_pos, adj_neg)
    jax.block_until_ready((output, h_agg_pos, h_agg_neg))

    assert output.shape == (N, DIM_OUT)
    assert h_agg_pos.shape == (N, DIM_OUT)
    assert h_agg_neg.shape == (N, DIM_OUT)
    assert bool(jnp.all(jnp.isfinite(output)))

    print("KERNEL_OK")
</pallas_src>

<mosaic_0001>
module attributes {stable_mosaic.version = 11 : i64} {
  func.func private @main(%arg0: i32) attributes {dimension_semantics = [#tpu.dimension_semantics<core_parallel>], iteration_bounds = array<i64: 2>, tpu.core_type = #tpu.core_type<sc_scalar_subcore>, window_params = []} {
    return
  }
}

module attributes {stable_mosaic.version = 11 : i64} {
  func.func private @main(%arg0: i32) attributes {dimension_semantics = [#tpu.dimension_semantics<core_parallel>], iteration_bounds = array<i64: 2>, tpu.core_type = #tpu.core_type<sc_scalar_subcore>, window_params = []} {
    return
  }
}

module attributes {stable_mosaic.version = 11 : i64} {
  func.func @_matmul_bias_kernel(%arg0: i32, %arg1: i32, %arg2: i32, %arg3: memref<16x128xf32, #tpu.memory_space<vmem>>, %arg4: memref<128x128xf32, #tpu.memory_space<vmem>>, %arg5: memref<1x128xf32, #tpu.memory_space<vmem>>, %arg6: memref<16x128xf32, #tpu.memory_space<vmem>>) attributes {dimension_semantics = [#tpu.dimension_semantics<parallel>, #tpu.dimension_semantics<parallel>, #tpu.dimension_semantics<arbitrary>], iteration_bounds = array<i64: 1, 1, 1>, scalar_prefetch = 0 : i64, scratch_operands = 0 : i64, tpu.core_type = #tpu.core_type<tc>, window_params = [{transform_indices = @transform_0, window_bounds = array<i64: 16, 128>}, {transform_indices = @transform_1, window_bounds = array<i64: 128, 128>}, {transform_indices = @transform_2, window_bounds = array<i64: 1, 128>}, {transform_indices = @transform_3, window_bounds = array<i64: 16, 128>}]} {
    %c0_i32 = arith.constant 0 : i32
    %0 = arith.cmpi eq, %arg2, %c0_i32 : i32
    %1 = arith.extui %0 : i1 to i32
    %c0_i32_0 = arith.constant 0 : i32
    %2 = arith.cmpi ne, %1, %c0_i32_0 : i32
    scf.if %2 {
      %c0_8 = arith.constant 0 : index
      %c0_9 = arith.constant 0 : index
      %11 = vector.load %arg5[%c0_8, %c0_9] : memref<1x128xf32, #tpu.memory_space<vmem>>, vector<1x128xf32>
      %12 = vector.shape_cast %11 : vector<1x128xf32> to vector<1x128xf32>
      %13 = vector.broadcast %12 : vector<1x128xf32> to vector<16x128xf32>
      %c0_10 = arith.constant 0 : index
      %c0_11 = arith.constant 0 : index
      %14 = vector.load %arg6[%c0_10, %c0_11] : memref<16x128xf32, #tpu.memory_space<vmem>>, vector<16x128xf32>
      tpu.vector_store %arg6[%c0_10, %c0_11], %13 {strides = array<i32>} : memref<16x128xf32, #tpu.memory_space<vmem>>, vector<16x128xf32>,
    } else {
    }
    %c0 = arith.constant 0 : index
    %c0_1 = arith.constant 0 : index
    %3 = vector.load %arg6[%c0, %c0_1] : memref<16x128xf32, #tpu.memory_space<vmem>>, vector<16x128xf32>
    %c0_2 = arith.constant 0 : index
    %c0_3 = arith.constant 0 : index
    %4 = vector.load %arg3[%c0_2, %c0_3] : memref<16x128xf32, #tpu.memory_space<vmem>>, vector<16x128xf32>
    %5 = arith.truncf %4 : vector<16x128xf32> to vector<16x128xbf16>
    %c0_4 = arith.constant 0 : index
    %c0_5 = arith.constant 0 : index
    %6 = vector.load %arg4[%c0_4, %c0_5] : memref<128x128xf32, #tpu.memory_space<vmem>>, vector<128x128xf32>
    %7 = arith.truncf %6 : vector<128x128xf32> to vector<128x128xbf16>
    %cst = arith.constant dense<0.000000e+00> : vector<16x128xf32>
    %8 = tpu.matmul %5, %7, %cst {dimension_numbers = #tpu.dot_dimension_numbers<[1], [0], [0], [1], [0, 0, 1, 1], [], []>} : vector<16x128xbf16>, vector<128x128xbf16>, vector<16x128xf32> -> vector<16x128xf32>
    %9 = arith.addf %3, %8 : vector<16x128xf32>
    %c0_6 = arith.constant 0 : index
    %c0_7 = arith.constant 0 : index
    %10 = vector.load %arg6[%c0_6, %c0_7] : memref<16x128xf32, #tpu.memory_space<vmem>>, vector<16x128xf32>
    tpu.vector_store %arg6[%c0_6, %c0_7], %9 {strides = array<i32>} : memref<16x128xf32, #tpu.memory_space<vmem>>, vector<16x128xf32>,
    return
  }
  func.func @transform_0(%arg0: i32, %arg1: i32, %arg2: i32) -> (i32, i32) {
    %c0_i32 = arith.constant 0 : i32
    return %arg0, %arg2 : i32, i32
  }
  func.func @transform_1(%arg0: i32, %arg1: i32, %arg2: i32) -> (i32, i32) {
    %c0_i32 = arith.constant 0 : i32
    return %arg2, %arg1 : i32, i32
  }
  func.func @transform_2(%arg0: i32, %arg1: i32, %arg2: i32) -> (i32, i32) {
    %c0_i32 = arith.constant 0 : i32
    %c0_i32_0 = arith.constant 0 : i32
    return %c0_i32, %arg1 : i32, i32
  }
  func.func @transform_3(%arg0: i32, %arg1: i32, %arg2: i32) -> (i32, i32) {
    %c0_i32 = arith.constant 0 : i32
    return %arg0, %arg1 : i32, i32
  }
}

module attributes {stable_mosaic.version = 11 : i64} {
  func.func @_segment_agg_kernel(%arg0: i32, %arg1: memref<33xi32, #tpu.memory_space<smem>>, %arg2: memref<64xi32, #tpu.memory_space<smem>>, %arg3: memref<64xf32, #tpu.memory_space<smem>>, %arg4: memref<32x128xf32, #tpu.memory_space<vmem>>, %arg5: memref<16x128xf32, #tpu.memory_space<vmem>>) attributes {dimension_semantics = [#tpu.dimension_semantics<parallel>], iteration_bounds = array<i64: 2>, scalar_prefetch = 0 : i64, scratch_operands = 0 : i64, tpu.core_type = #tpu.core_type<tc>, window_params = [{transform_indices = @transform_0, window_bounds = array<i64: 33>}, {transform_indices = @transform_1, window_bounds = array<i64: 64>}, {transform_indices = @transform_2, window_bounds = array<i64: 64>}, {pipeline_mode = #tpu.pipeline_mode<synchronous>, transform_indices = @transform_3, window_bounds = array<i64: 32, 128>}, {transform_indices = @transform_4, window_bounds = array<i64: 16, 128>}]} {
    %c16_i32 = arith.constant 16 : i32
    %0 = arith.muli %arg0, %c16_i32 : i32
    %c0_i32 = arith.constant 0 : i32
    %1 = arith.addi %0, %c0_i32 : i32
    %2 = arith.index_cast %1 : i32 to index
    %3 = memref.load %arg1[%2] : memref<33xi32, #tpu.memory_space<smem>>
    %c0_i32_0 = arith.constant 0 : i32
    %4 = arith.addi %0, %c0_i32_0 : i32
    %c1_i32 = arith.constant 1 : i32
    %5 = arith.addi %4, %c1_i32 : i32
    %6 = arith.index_cast %5 : i32 to index
    %7 = memref.load %arg1[%6] : memref<33xi32, #tpu.memory_space<smem>>
    %cst = arith.constant 0.000000e+00 : f32
    %8 = vector.broadcast %cst : f32 to vector<1x128xf32>
    %9 = arith.subi %7, %3 : i32
    %10 = arith.addi %3, %9 : i32
    %c1_i32_1 = arith.constant 1 : i32
    %11 = scf.for %arg6 = %3 to %10 step %c1_i32_1 iter_args(%arg7 = %8) -> (vector<1x128xf32>)  : i32 {
      %193 = arith.index_cast %arg6 : i32 to index
      %194 = memref.load %arg3[%193] : memref<64xf32, #tpu.memory_space<smem>>
      %195 = arith.index_cast %arg6 : i32 to index
      %196 = memref.load %arg2[%195] : memref<64xi32, #tpu.memory_space<smem>>
      %197 = arith.index_cast %196 : i32 to index
      %c0_79 = arith.constant 0 : index
      %198 = vector.load %arg4[%197, %c0_79] : memref<32x128xf32, #tpu.memory_space<vmem>>, vector<1x128xf32>
      %199 = vector.broadcast %194 : f32 to vector<1x128xf32>
      %200 = arith.mulf %199, %198 : vector<1x128xf32>
      %201 = arith.addf %arg7, %200 : vector<1x128xf32>
      scf.yield %201 : vector<1x128xf32>
    }
    %c0 = arith.constant 0 : index
    %c0_2 = arith.constant 0 : index
    %12 = vector.load %arg5[%c0, %c0_2] : memref<16x128xf32, #tpu.memory_space<vmem>>, vector<1x128xf32>
    tpu.vector_store %arg5[%c0, %c0_2], %11 {strides = array<i32>} : memref<16x128xf32, #tpu.memory_space<vmem>>, vector<1x128xf32>,
    %c1_i32_3 = arith.constant 1 : i32
    %13 = arith.addi %0, %c1_i32_3 : i32
    %14 = arith.index_cast %13 : i32 to index
    %15 = memref.load %arg1[%14] : memref<33xi32, #tpu.memory_space<smem>>
    %c1_i32_4 = arith.constant 1 : i32
    %16 = arith.addi %0, %c1_i32_4 : i32
    %c1_i32_5 = arith.constant 1 : i32
    %17 = arith.addi %16, %c1_i32_5 : i32
    %18 = arith.index_cast %17 : i32 to index
    %19 = memref.load %arg1[%18] : memref<33xi32, #tpu.memory_space<smem>>
    %cst_6 = arith.constant 0.000000e+00 : f32
    %20 = vector.broadcast %cst_6 : f32 to vector<1x128xf32>
    %21 = arith.subi %19, %15 : i32
    %22 = arith.addi %15, %21 : i32
    %c1_i32_7 = arith.constant 1 : i32
    %23 = scf.for %arg6 = %15 to %22 step %c1_i32_7 iter_args(%arg7 = %20) -> (vector<1x128xf32>)  : i32 {
      %193 = arith.index_cast %arg6 : i32 to index
      %194 = memref.load %arg3[%193] : memref<64xf32, #tpu.memory_space<smem>>
      %195 = arith.index_cast %arg6 : i32 to index
      %196 = memref.load %arg2[%195] : memref<64xi32, #tpu.memory_space<smem>>
      %197 = arith.index_cast %196 : i32 to index
      %c0_79 = arith.constant 0 : index
      %198 = vector.load %arg4[%197, %c0_79] : memref<32x128xf32, #tpu.memory_space<vmem>>, vector<1x128xf32>
      %199 = vector.broadcast %194 : f32 to vector<1x128xf32>
      %200 = arith.mulf %199, %198 : vector<1x128xf32>
      %201 = arith.addf %arg7, %200 : vector<1x128xf32>
      scf.yield %201 : vector<1x128xf32>
    }
    %c1 = arith.constant 1 : index
    %c0_8 = arith.constant 0 : index
    %24 = vector.load %arg5[%c1, %c0_8] : memref<16x128xf32, #tpu.memory_space<vmem>>, vector<1x128xf32>
    tpu.vector_store %arg5[%c1, %c0_8], %23 {strides = array<i32>} : memref<16x128xf32, #tpu.memory_space<vmem>>, vector<1x128xf32>,
    %c2_i32 = arith.constant 2 : i32
    %25 = arith.addi %0, %c2_i32 : i32
    %26 = arith.index_cast %25 : i32 to index
    %27 = memref.load %arg1[%26] : memref<33xi32, #tpu.memory_space<smem>>
    %c2_i32_9 = arith.constant 2 : i32
    %28 = arith.addi %0, %c2_i32_9 : i32
    %c1_i32_10 = arith.constant 1 : i32
    %29 = arith.addi %28, %c1_i32_10 : i32
    %30 = arith.index_cast %29 : i32 to index
    %31 = memref.load %arg1[%30] : memref<33xi32, #tpu.memory_space<smem>>
    %cst_11 = arith.constant 0.000000e+00 : f32
    %32 = vector.broadcast %cst_11 : f32 to vector<1x128xf32>
    %33 = arith.subi %31, %27 : i32
    %34 = arith.addi %27, %33 : i32
    %c1_i32_12 = arith.constant 1 : i32
    %35 = scf.for %arg6 = %27 to %34 step %c1_i32_12 iter_args(%arg7 = %32) -> (vector<1x128xf32>)  : i32 {
      %193 = arith.index_cast %arg6 : i32 to index
      %194 = memref.load %arg3[%193] : memref<64xf32, #tpu.memory_space<smem>>
      %195 = arith.index_cast %arg6 : i32 to index
      %196 = memref.load %arg2[%195] : memref<64xi32, #tpu.memory_space<smem>>
      %197 = arith.index_cast %196 : i32 to index
      %c0_79 = arith.constant 0 : index
      %198 = vector.load %arg4[%197, %c0_79] : memref<32x128xf32, #tpu.memory_space<vmem>>, vector<1x128xf32>
      %199 = vector.broadcast %194 : f32 to vector<1x128xf32>
      %200 = arith.mulf %199, %198 : vector<1x128xf32>
      %201 = arith.addf %arg7, %200 : vector<1x128xf32>
      scf.yield %201 : vector<1x128xf32>
    }
    %c2 = arith.constant 2 : index
    %c0_13 = arith.constant 0 : index
    %36 = vector.load %arg5[%c2, %c0_13] : memref<16x128xf32, #tpu.memory_space<vmem>>, vector<1x128xf32>
    tpu.vector_store %arg5[%c2, %c0_13], %35 {strides = array<i32>} : memref<16x128xf32, #tpu.memory_space<vmem>>, vector<1x128xf32>,
    %c3_i32 = arith.constant 3 : i32
    %37 = arith.addi %0, %c3_i32 : i32
    %38 = arith.index_cast %37 : i32 to index
    %39 = memref.load %arg1[%38] : memref<33xi32, #tpu.memory_space<smem>>
    %c3_i32_14 = arith.constant 3 : i32
    %40 = arith.addi %0, %c3_i32_14 : i32
    %c1_i32_15 = arith.constant 1 : i32
    %41 = arith.addi %40, %c1_i32_15 : i32
    %42 = arith.index_cast %41 : i32 to index
    %43 = memref.load %arg1[%42] : memref<33xi32, #tpu.memory_space<smem>>
    %cst_16 = arith.constant 0.000000e+00 : f32
    %44 = vector.broadcast %cst_16 : f32 to vector<1x128xf32>
    %45 = arith.subi %43, %39 : i32
    %46 = arith.addi %39, %45 : i32
    %c1_i32_17 = arith.constant 1 : i32
    %47 = scf.for %arg6 = %39 to %46 step %c1_i32_17 iter_args(%arg7 = %44) -> (vector<1x128xf32>)  : i32 {
      %193 = arith.index_cast %arg6 : i32 to index
      %194 = memref.load %arg3[%193] : memref<64xf32, #tpu.memory_space<smem>>
      %195 = arith.index_cast %arg6 : i32 to index
      %196 = memref.load %arg2[%195] : memref<64xi32, #tpu.memory_space<smem>>
      %197 = arith.index_cast %196 : i32 to index
      %c0_79 = arith.constant 0 : index
      %198 = vector.load %arg4[%197, %c0_79] : memref<32x128xf32, #tpu.memory_space<vmem>>, vector<1x128xf32>
      %199 = vector.broadcast %194 : f32 to vector<1x128xf32>
      %200 = arith.mulf %199, %198 : vector<1x128xf32>
      %201 = arith.addf %arg7, %200 : vector<1x128xf32>
      scf.yield %201 : vector<1x128xf32>
    }
    %c3 = arith.constant 3 : index
    %c0_18 = arith.constant 0 : index
    %48 = vector.load %arg5[%c3, %c0_18] : memref<16x128xf32, #tpu.memory_space<vmem>>, vector<1x128xf32>
    tpu.vector_store %arg5[%c3, %c0_18], %47 {strides = array<i32>} : memref<16x128xf32, #tpu.memory_space<vmem>>, vector<1x128xf32>,
    %c4_i32 = arith.constant 4 : i32
    %49 = arith.addi %0, %c4_i32 : i32
    %50 = arith.index_cast %49 : i32 to index
    %51 = memref.load %arg1[%50] : memref<33xi32, #tpu.memory_space<smem>>
    %c4_i32_19 = arith.constant 4 : i32
    %52 = arith.addi %0, %c4_i32_19 : i32
    %c1_i32_20 = arith.constant 1 : i32
    %53 = arith.addi %52, %c1_i32_20 : i32
    %54 = arith.index_cast %53 : i32 to index
    %55 = memref.load %arg1[%54] : memref<33xi32, #tpu.memory_space<smem>>
    %cst_21 = arith.constant 0.000000e+00 : f32
    %56 = vector.broadcast %cst_21 : f32 to vector<1x128xf32>
    %57 = arith.subi %55, %51 : i32
    %58 = arith.addi %51, %57 : i32
    %c1_i32_22 = arith.constant 1 : i32
    %59 = scf.for %arg6 = %51 to %58 step %c1_i32_22 iter_args(%arg7 = %56) -> (vector<1x128xf32>)  : i32 {
      %193 = arith.index_cast %arg6 : i32 to index
      %194 = memref.load %arg3[%193] : memref<64xf32, #tpu.memory_space<smem>>
      %195 = arith.index_cast %arg6 : i32 to index
      %196 = memref.load %arg2[%195] : memref<64xi32, #tpu.memory_space<smem>>
      %197 = arith.index_cast %196 : i32 to index
      %c0_79 = arith.constant 0 : index
      %198 = vector.load %arg4[%197, %c0_79] : memref<32x128xf32, #tpu.memory_space<vmem>>, vector<1x128xf32>
      %199 = vector.broadcast %194 : f32 to vector<1x128xf32>
      %200 = arith.mulf %199, %198 : vector<1x128xf32>
      %201 = arith.addf %arg7, %200 : vector<1x128xf32>
      scf.yield %201 : vector<1x128xf32>
    }
    %c4 = arith.constant 4 : index
    %c0_23 = arith.constant 0 : index
    %60 = vector.load %arg5[%c4, %c0_23] : memref<16x128xf32, #tpu.memory_space<vmem>>, vector<1x128xf32>
    tpu.vector_store %arg5[%c4, %c0_23], %59 {strides = array<i32>} : memref<16x128xf32, #tpu.memory_space<vmem>>, vector<1x128xf32>,
    %c5_i32 = arith.constant 5 : i32
    %61 = arith.addi %0, %c5_i32 : i32
    %62 = arith.index_cast %61 : i32 to index
    %63 = memref.load %arg1[%62] : memref<33xi32, #tpu.memory_space<smem>>
    %c5_i32_24 = arith.constant 5 : i32
    %64 = arith.addi %0, %c5_i32_24 : i32
    %c1_i32_25 = arith.constant 1 : i32
    %65 = arith.addi %64, %c1_i32_25 : i32
    %66 = arith.index_cast %65 : i32 to index
    %67 = memref.load %arg1[%66] : memref<33xi32, #tpu.memory_space<smem>>
    %cst_26 = arith.constant 0.000000e+00 : f32
    %68 = vector.broadcast %cst_26 : f32 to vector<1x128xf32>
    %69 = arith.subi %67, %63 : i32
    %70 = arith.addi %63, %69 : i32
    %c1_i32_27 = arith.constant 1 : i32
    %71 = scf.for %arg6 = %63 to %70 step %c1_i32_27 iter_args(%arg7 = %68) -> (vector<1x128xf32>)  : i32 {
      %193 = arith.index_cast %arg6 : i32 to index
      %194 = memref.load %arg3[%193] : memref<64xf32, #tpu.memory_space<smem>>
      %195 = arith.index_cast %arg6 : i32 to index
      %196 = memref.load %arg2[%195] : memref<64xi32, #tpu.memory_space<smem>>
      %197 = arith.index_cast %196 : i32 to index
      %c0_79 = arith.constant 0 : index
      %198 = vector.load %arg4[%197, %c0_79] : memref<32x128xf32, #tpu.memory_space<vmem>>, vector<1x128xf32>
      %199 = vector.broadcast %194 : f32 to vector<1x128xf32>
      %200 = arith.mulf %199, %198 : vector<1x128xf32>
      %201 = arith.addf %arg7, %200 : vector<1x128xf32>
      scf.yield %201 : vector<1x128xf32>
    }
    %c5 = arith.constant 5 : index
    %c0_28 = arith.constant 0 : index
    %72 = vector.load %arg5[%c5, %c0_28] : memref<16x128xf32, #tpu.memory_space<vmem>>, vector<1x128xf32>
    tpu.vector_store %arg5[%c5, %c0_28], %71 {strides = array<i32>} : memref<16x128xf32, #tpu.memory_space<vmem>>, vector<1x128xf32>,
    %c6_i32 = arith.constant 6 : i32
    %73 = arith.addi %0, %c6_i32 : i32
    %74 = arith.index_cast %73 : i32 to index
    %75 = memref.load %arg1[%74] : memref<33xi32, #tpu.memory_space<smem>>
    %c6_i32_29 = arith.constant 6 : i32
    %76 = arith.addi %0, %c6_i32_29 : i32
    %c1_i32_30 = arith.constant 1 : i32
    %77 = arith.addi %76, %c1_i32_30 : i32
    %78 = arith.index_cast %77 : i32 to index
    %79 = memref.load %arg1[%78] : memref<33xi32, #tpu.memory_space<smem>>
    %cst_31 = arith.constant 0.000000e+00 : f32
    %80 = vector.broadcast %cst_31 : f32 to vector<1x128xf32>
    %81 = arith.subi %79, %75 : i32
    %82 = arith.addi %75, %81 : i32
    %c1_i32_32 = arith.constant 1 : i32
    %83 = scf.for %arg6 = %75 to %82 step %c1_i32_32 iter_args(%arg7 = %80) -> (vector<1x128xf32>)  : i32 {
      %193 = arith.index_cast %arg6 : i32 to index
      %194 = memref.load %arg3[%193] : memref<64xf32, #tpu.memory_space<smem>>
      %195 = arith.index_cast %arg6 : i32 to index
      %196 = memref.load %arg2[%195] : memref<64xi32, #tpu.memory_space<smem>>
      %197 = arith.index_cast %196 : i32 to index
      %c0_79 = arith.constant 0 : index
      %198 = vector.load %arg4[%197, %c0_79] : memref<32x128xf32, #tpu.memory_space<vmem>>, vector<1x128xf32>
      %199 = vector.broadcast %194 : f32 to vector<1x128xf32>
      %200 = arith.mulf %199, %198 : vector<1x128xf32>
      %201 = arith.addf %arg7, %200 : vector<1x128xf32>
      scf.yield %201 : vector<1x128xf32>
    }
    %c6 = arith.constant 6 : index
    %c0_33 = arith.constant 0 : index
    %84 = vector.load %arg5[%c6, %c0_33] : memref<16x128xf32, #tpu.memory_space<vmem>>, vector<1x128xf32>
    tpu.vector_store %arg5[%c6, %c0_33], %83 {strides = array<i32>} : memref<16x128xf32, #tpu.memory_space<vmem>>, vector<1x128xf32>,
    %c7_i32 = arith.constant 7 : i32
    %85 = arith.addi %0, %c7_i32 : i32
    %86 = arith.index_cast %85 : i32 to index
    %87 = memref.load %arg1[%86] : memref<33xi32, #tpu.memory_space<smem>>
    %c7_i32_34 = arith.constant 7 : i32
    %88 = arith.addi %0, %c7_i32_34 : i32
    %c1_i32_35 = arith.constant 1 : i32
    %89 = arith.addi %88, %c1_i32_35 : i32
    %90 = arith.index_cast %89 : i32 to index
    %91 = memref.load %arg1[%90] : memref<33xi32, #tpu.memory_space<smem>>
    %cst_36 = arith.constant 0.000000e+00 : f32
    %92 = vector.broadcast %cst_36 : f32 to vector<1x128xf32>
    %93 = arith.subi %91, %87 : i32
    %94 = arith.addi %87, %93 : i32
    %c1_i32_37 = arith.constant 1 : i32
    %95 = scf.for %arg6 = %87 to %94 step %c1_i32_37 iter_args(%arg7 = %92) -> (vector<1x128xf32>)  : i32 {
      %193 = arith.index_cast %arg6 : i32 to index
      %194 = memref.load %arg3[%193] : memref<64xf32, #tpu.memory_space<smem>>
      %195 = arith.index_cast %arg6 : i32 to index
      %196 = memref.load %arg2[%195] : memref<64xi32, #tpu.memory_space<smem>>
      %197 = arith.index_cast %196 : i32 to index
      %c0_79 = arith.constant 0 : index
      %198 = vector.load %arg4[%197, %c0_79] : memref<32x128xf32, #tpu.memory_space<vmem>>, vector<1x128xf32>
      %199 = vector.broadcast %194 : f32 to vector<1x128xf32>
      %200 = arith.mulf %199, %198 : vector<1x128xf32>
      %201 = arith.addf %arg7, %200 : vector<1x128xf32>
      scf.yield %201 : vector<1x128xf32>
    }
    %c7 = arith.constant 7 : index
    %c0_38 = arith.constant 0 : index
    %96 = vector.load %arg5[%c7, %c0_38] : memref<16x128xf32, #tpu.memory_space<vmem>>, vector<1x128xf32>
    tpu.vector_store %arg5[%c7, %c0_38], %95 {strides = array<i32>} : memref<16x128xf32, #tpu.memory_space<vmem>>, vector<1x128xf32>,
    %c8_i32 = arith.constant 8 : i32
    %97 = arith.addi %0, %c8_i32 : i32
    %98 = arith.index_cast %97 : i32 to index
    %99 = memref.load %arg1[%98] : memref<33xi32, #tpu.memory_space<smem>>
    %c8_i32_39 = arith.constant 8 : i32
    %100 = arith.addi %0, %c8_i32_39 : i32
    %c1_i32_40 = arith.constant 1 : i32
    %101 = arith.addi %100, %c1_i32_40 : i32
    %102 = arith.index_cast %101 : i32 to index
    %103 = memref.load %arg1[%102] : memref<33xi32, #tpu.memory_space<smem>>
    %cst_41 = arith.constant 0.000000e+00 : f32
    %104 = vector.broadcast %cst_41 : f32 to vector<1x128xf32>
    %105 = arith.subi %103, %99 : i32
    %106 = arith.addi %99, %105 : i32
    %c1_i32_42 = arith.constant 1 : i32
    %107 = scf.for %arg6 = %99 to %106 step %c1_i32_42 iter_args(%arg7 = %104) -> (vector<1x128xf32>)  : i32 {
      %193 = arith.index_cast %arg6 : i32 to index
      %194 = memref.load %arg3[%193] : memref<64xf32, #tpu.memory_space<smem>>
      %195 = arith.index_cast %arg6 : i32 to index
      %196 = memref.load %arg2[%195] : memref<64xi32, #tpu.memory_space<smem>>
      %197 = arith.index_cast %196 : i32 to index
      %c0_79 = arith.constant 0 : index
      %198 = vector.load %arg4[%197, %c0_79] : memref<32x128xf32, #tpu.memory_space<vmem>>, vector<1x128xf32>
      %199 = vector.broadcast %194 : f32 to vector<1x128xf32>
      %200 = arith.mulf %199, %198 : vector<1x128xf32>
      %201 = arith.addf %arg7, %200 : vector<1x128xf32>
      scf.yield %201 : vector<1x128xf32>
    }
    %c8 = arith.constant 8 : index
    %c0_43 = arith.constant 0 : index
    %108 = vector.load %arg5[%c8, %c0_43] : memref<16x128xf32, #tpu.memory_space<vmem>>, vector<1x128xf32>
    tpu.vector_store %arg5[%c8, %c0_43], %107 {strides = array<i32>} : memref<16x128xf32, #tpu.memory_space<vmem>>, vector<1x128xf32>,
    %c9_i32 = arith.constant 9 : i32
    %109 = arith.addi %0, %c9_i32 : i32
    %110 = arith.index_cast %109 : i32 to index
    %111 = memref.load %arg1[%110] : memref<33xi32, #tpu.memory_space<smem>>
    %c9_i32_44 = arith.constant 9 : i32
    %112 = arith.addi %0, %c9_i32_44 : i32
    %c1_i32_45 = arith.constant 1 : i32
    %113 = arith.addi %112, %c1_i32_45 : i32
    %114 = arith.index_cast %113 : i32 to index
    %115 = memref.load %arg1[%114] : memref<33xi32, #tpu.memory_space<smem>>
    %cst_46 = arith.constant 0.000000e+00 : f32
    %116 = vector.broadcast %cst_46 : f32 to vector<1x128xf32>
    %117 = arith.subi %115, %111 : i32
    %118 = arith.addi %111, %117 : i32
    %c1_i32_47 = arith.constant 1 : i32
    %119 = scf.for %arg6 = %111 to %118 step %c1_i32_47 iter_args(%arg7 = %116) -> (vector<1x128xf32>)  : i32 {
      %193 = arith.index_cast %arg6 : i32 to index
      %194 = memref.load %arg3[%193] : memref<64xf32, #tpu.memory_space<smem>>
      %195 = arith.index_cast %arg6 : i32 to index
      %196 = memref.load %arg2[%195] : memref<64xi32, #tpu.memory_space<smem>>
      %197 = arith.index_cast %196 : i32 to index
      %c0_79 = arith.constant 0 : index
      %198 = vector.load %arg4[%197, %c0_79] : memref<32x128xf32, #tpu.memory_space<vmem>>, vector<1x128xf32>
      %199 = vector.broadcast %194 : f32 to vector<1x128xf32>
      %200 = arith.mulf %199, %198 : vector<1x128xf32>
      %201 = arith.addf %arg7, %200 : vector<1x128xf32>
      scf.yield %201 : vector<1x128xf32>
    }
    %c9 = arith.constant 9 : index
    %c0_48 = arith.constant 0 : index
    %120 = vector.load %arg5[%c9, %c0_48] : memref<16x128xf32, #tpu.memory_space<vmem>>, vector<1x128xf32>
    tpu.vector_store %arg5[%c9, %c0_48], %119 {strides = array<i32>} : memref<16x128xf32, #tpu.memory_space<vmem>>, vector<1x128xf32>,
    %c10_i32 = arith.constant 10 : i32
    %121 = arith.addi %0, %c10_i32 : i32
    %122 = arith.index_cast %121 : i32 to index
    %123 = memref.load %arg1[%122] : memref<33xi32, #tpu.memory_space<smem>>
    %c10_i32_49 = arith.constant 10 : i32
    %124 = arith.addi %0, %c10_i32_49 : i32
    %c1_i32_50 = arith.constant 1 : i32
    %125 = arith.addi %124, %c1_i32_50 : i32
    %126 = arith.index_cast %125 : i32 to index
    %127 = memref.load %arg1[%126] : memref<33xi32, #tpu.memory_space<smem>>
    %cst_51 = arith.constant 0.000000e+00 : f32
    %128 = vector.broadcast %cst_51 : f32 to vector<1x128xf32>
    %129 = arith.subi %127, %123 : i32
    %130 = arith.addi %123, %129 : i32
    %c1_i32_52 = arith.constant 1 : i32
    %131 = scf.for %arg6 = %123 to %130 step %c1_i32_52 iter_args(%arg7 = %128) -> (vector<1x128xf32>)  : i32 {
      %193 = arith.index_cast %arg6 : i32 to index
      %194 = memref.load %arg3[%193] : memref<64xf32, #tpu.memory_space<smem>>
      %195 = arith.index_cast %arg6 : i32 to index
      %196 = memref.load %arg2[%195] : memref<64xi32, #tpu.memory_space<smem>>
      %197 = arith.index_cast %196 : i32 to index
      %c0_79 = arith.constant 0 : index
      %198 = vector.load %arg4[%197, %c0_79] : memref<32x128xf32, #tpu.memory_space<vmem>>, vector<1x128xf32>
      %199 = vector.broadcast %194 : f32 to vector<1x128xf32>
      %200 = arith.mulf %199, %198 : vector<1x128xf32>
      %201 = arith.addf %arg7, %200 : vector<1x128xf32>
      scf.yield %201 : vector<1x128xf32>
    }
    %c10 = arith.constant 10 : index
    %c0_53 = arith.constant 0 : index
    %132 = vector.load %arg5[%c10, %c0_53] : memref<16x128xf32, #tpu.memory_space<vmem>>, vector<1x128xf32>
    tpu.vector_store %arg5[%c10, %c0_53], %131 {strides = array<i32>} : memref<16x128xf32, #tpu.memory_space<vmem>>, vector<1x128xf32>,
    %c11_i32 = arith.constant 11 : i32
    %133 = arith.addi %0, %c11_i32 : i32
    %134 = arith.index_cast %133 : i32 to index
    %135 = memref.load %arg1[%134] : memref<33xi32, #tpu.memory_space<smem>>
    %c11_i32_54 = arith.constant 11 : i32
    %136 = arith.addi %0, %c11_i32_54 : i32
    %c1_i32_55 = arith.constant 1 : i32
    %137 = arith.addi %136, %c1_i32_55 : i32
    %138 = arith.index_cast %137 : i32 to index
    %139 = memref.load %arg1[%138] : memref<33xi32, #tpu.memory_space<smem>>
    %cst_56 = arith.constant 0.000000e+00 : f32
    %140 = vector.broadcast %cst_56 : f32 to vector<1x128xf32>
    %141 = arith.subi %139, %135 : i32
    %142 = arith.addi %135, %141 : i32
    %c1_i32_57 = arith.constant 1 : i32
    %143 = scf.for %arg6 = %135 to %142 step %c1_i32_57 iter_args(%arg7 = %140) -> (vector<1x128xf32>)  : i32 {
      %193 = arith.index_cast %arg6 : i32 to index
      %194 = memref.load %arg3[%193] : memref<64xf32, #tpu.memory_space<smem>>
      %195 = arith.index_cast %arg6 : i32 to index
      %196 = memref.load %arg2[%195] : memref<64xi32, #tpu.memory_space<smem>>
      %197 = arith.index_cast %196 : i32 to index
      %c0_79 = arith.constant 0 : index
      %198 = vector.load %arg4[%197, %c0_79] : memref<32x128xf32, #tpu.memory_space<vmem>>, vector<1x128xf32>
      %199 = vector.broadcast %194 : f32 to vector<1x128xf32>
      %200 = arith.mulf %199, %198 : vector<1x128xf32>
      %201 = arith.addf %arg7, %200 : vector<1x128xf32>
      scf.yield %201 : vector<1x128xf32>
    }
    %c11 = arith.constant 11 : index
    %c0_58 = arith.constant 0 : index
    %144 = vector.load %arg5[%c11, %c0_58] : memref<16x128xf32, #tpu.memory_space<vmem>>, vector<1x128xf32>
    tpu.vector_store %arg5[%c11, %c0_58], %143 {strides = array<i32>} : memref<16x128xf32, #tpu.memory_space<vmem>>, vector<1x128xf32>,
    %c12_i32 = arith.constant 12 : i32
    %145 = arith.addi %0, %c12_i32 : i32
    %146 = arith.index_cast %145 : i32 to index
    %147 = memref.load %arg1[%146] : memref<33xi32, #tpu.memory_space<smem>>
    %c12_i32_59 = arith.constant 12 : i32
    %148 = arith.addi %0, %c12_i32_59 : i32
    %c1_i32_60 = arith.constant 1 : i32
    %149 = arith.addi %148, %c1_i32_60 : i32
    %150 = arith.index_cast %149 : i32 to index
    %151 = memref.load %arg1[%150] : memref<33xi32, #tpu.memory_space<smem>>
    %cst_61 = arith.constant 0.000000e+00 : f32
    %152 = vector.broadcast %cst_61 : f32 to vector<1x128xf32>
    %153 = arith.subi %151, %147 : i32
    %154 = arith.addi %147, %153 : i32
    %c1_i32_62 = arith.constant 1 : i32
    %155 = scf.for %arg6 = %147 to %154 step %c1_i32_62 iter_args(%arg7 = %152) -> (vector<1x128xf32>)  : i32 {
      %193 = arith.index_cast %arg6 : i32 to index
      %194 = memref.load %arg3[%193] : memref<64xf32, #tpu.memory_space<smem>>
      %195 = arith.index_cast %arg6 : i32 to index
      %196 = memref.load %arg2[%195] : memref<64xi32, #tpu.memory_space<smem>>
      %197 = arith.index_cast %196 : i32 to index
      %c0_79 = arith.constant 0 : index
      %198 = vector.load %arg4[%197, %c0_79] : memref<32x128xf32, #tpu.memory_space<vmem>>, vector<1x128xf32>
      %199 = vector.broadcast %194 : f32 to vector<1x128xf32>
      %200 = arith.mulf %199, %198 : vector<1x128xf32>
      %201 = arith.addf %arg7, %200 : vector<1x128xf32>
      scf.yield %201 : vector<1x128xf32>
    }
    %c12 = arith.constant 12 : index
    %c0_63 = arith.constant 0 : index
    %156 = vector.load %arg5[%c12, %c0_63] : memref<16x128xf32, #tpu.memory_space<vmem>>, vector<1x128xf32>
    tpu.vector_store %arg5[%c12, %c0_63], %155 {strides = array<i32>} : memref<16x128xf32, #tpu.memory_space<vmem>>, vector<1x128xf32>,
    %c13_i32 = arith.constant 13 : i32
    %157 = arith.addi %0, %c13_i32 : i32
    %158 = arith.index_cast %157 : i32 to index
    %159 = memref.load %arg1[%158] : memref<33xi32, #tpu.memory_space<smem>>
    %c13_i32_64 = arith.constant 13 : i32
    %160 = arith.addi %0, %c13_i32_64 : i32
    %c1_i32_65 = arith.constant 1 : i32
    %161 = arith.addi %160, %c1_i32_65 : i32
    %162 = arith.index_cast %161 : i32 to index
    %163 = memref.load %arg1[%162] : memref<33xi32, #tpu.memory_space<smem>>
    %cst_66 = arith.constant 0.000000e+00 : f32
    %164 = vector.broadcast %cst_66 : f32 to vector<1x128xf32>
    %165 = arith.subi %163, %159 : i32
    %166 = arith.addi %159, %165 : i32
    %c1_i32_67 = arith.constant 1 : i32
    %167 = scf.for %arg6 = %159 to %166 step %c1_i32_67 iter_args(%arg7 = %164) -> (vector<1x128xf32>)  : i32 {
      %193 = arith.index_cast %arg6 : i32 to index
      %194 = memref.load %arg3[%193] : memref<64xf32, #tpu.memory_space<smem>>
      %195 = arith.index_cast %arg6 : i32 to index
      %196 = memref.load %arg2[%195] : memref<64xi32, #tpu.memory_space<smem>>
      %197 = arith.index_cast %196 : i32 to index
      %c0_79 = arith.constant 0 : index
      %198 = vector.load %arg4[%197, %c0_79] : memref<32x128xf32, #tpu.memory_space<vmem>>, vector<1x128xf32>
      %199 = vector.broadcast %194 : f32 to vector<1x128xf32>
      %200 = arith.mulf %199, %198 : vector<1x128xf32>
      %201 = arith.addf %arg7, %200 : vector<1x128xf32>
      scf.yield %201 : vector<1x128xf32>
    }
    %c13 = arith.constant 13 : index
    %c0_68 = arith.constant 0 : index
    %168 = vector.load %arg5[%c13, %c0_68] : memref<16x128xf32, #tpu.memory_space<vmem>>, vector<1x128xf32>
    tpu.vector_store %arg5[%c13, %c0_68], %167 {strides = array<i32>} : memref<16x128xf32, #tpu.memory_space<vmem>>, vector<1x128xf32>,
    %c14_i32 = arith.constant 14 : i32
    %169 = arith.addi %0, %c14_i32 : i32
    %170 = arith.index_cast %169 : i32 to index
    %171 = memref.load %arg1[%170] : memref<33xi32, #tpu.memory_space<smem>>
    %c14_i32_69 = arith.constant 14 : i32
    %172 = arith.addi %0, %c14_i32_69 : i32
    %c1_i32_70 = arith.constant 1 : i32
    %173 = arith.addi %172, %c1_i32_70 : i32
    %174 = arith.index_cast %173 : i32 to index
    %175 = memref.load %arg1[%174] : memref<33xi32, #tpu.memory_space<smem>>
    %cst_71 = arith.constant 0.000000e+00 : f32
    %176 = vector.broadcast %cst_71 : f32 to vector<1x128xf32>
    %177 = arith.subi %175, %171 : i32
    %178 = arith.addi %171, %177 : i32
    %c1_i32_72 = arith.constant 1 : i32
    %179 = scf.for %arg6 = %171 to %178 step %c1_i32_72 iter_args(%arg7 = %176) -> (vector<1x128xf32>)  : i32 {
      %193 = arith.index_cast %arg6 : i32 to index
      %194 = memref.load %arg3[%193] : memref<64xf32, #tpu.memory_space<smem>>
      %195 = arith.index_cast %arg6 : i32 to index
      %196 = memref.load %arg2[%195] : memref<64xi32, #tpu.memory_space<smem>>
      %197 = arith.index_cast %196 : i32 to index
      %c0_79 = arith.constant 0 : index
      %198 = vector.load %arg4[%197, %c0_79] : memref<32x128xf32, #tpu.memory_space<vmem>>, vector<1x128xf32>
      %199 = vector.broadcast %194 : f32 to vector<1x128xf32>
      %200 = arith.mulf %199, %198 : vector<1x128xf32>
      %201 = arith.addf %arg7, %200 : vector<1x128xf32>
      scf.yield %201 : vector<1x128xf32>
    }
    %c14 = arith.constant 14 : index
    %c0_73 = arith.constant 0 : index
    %180 = vector.load %arg5[%c14, %c0_73] : memref<16x128xf32, #tpu.memory_space<vmem>>, vector<1x128xf32>
    tpu.vector_store %arg5[%c14, %c0_73], %179 {strides = array<i32>} : memref<16x128xf32, #tpu.memory_space<vmem>>, vector<1x128xf32>,
    %c15_i32 = arith.constant 15 : i32
    %181 = arith.addi %0, %c15_i32 : i32
    %182 = arith.index_cast %181 : i32 to index
    %183 = memref.load %arg1[%182] : memref<33xi32, #tpu.memory_space<smem>>
    %c15_i32_74 = arith.constant 15 : i32
    %184 = arith.addi %0, %c15_i32_74 : i32
    %c1_i32_75 = arith.constant 1 : i32
    %185 = arith.addi %184, %c1_i32_75 : i32
    %186 = arith.index_cast %185 : i32 to index
    %187 = memref.load %arg1[%186] : memref<33xi32, #tpu.memory_space<smem>>
    %cst_76 = arith.constant 0.000000e+00 : f32
    %188 = vector.broadcast %cst_76 : f32 to vector<1x128xf32>
    %189 = arith.subi %187, %183 : i32
    %190 = arith.addi %183, %189 : i32
    %c1_i32_77 = arith.constant 1 : i32
    %191 = scf.for %arg6 = %183 to %190 step %c1_i32_77 iter_args(%arg7 = %188) -> (vector<1x128xf32>)  : i32 {
      %193 = arith.index_cast %arg6 : i32 to index
      %194 = memref.load %arg3[%193] : memref<64xf32, #tpu.memory_space<smem>>
      %195 = arith.index_cast %arg6 : i32 to index
      %196 = memref.load %arg2[%195] : memref<64xi32, #tpu.memory_space<smem>>
      %197 = arith.index_cast %196 : i32 to index
      %c0_79 = arith.constant 0 : index
      %198 = vector.load %arg4[%197, %c0_79] : memref<32x128xf32, #tpu.memory_space<vmem>>, vector<1x128xf32>
      %199 = vector.broadcast %194 : f32 to vector<1x128xf32>
      %200 = arith.mulf %199, %198 : vector<1x128xf32>
      %201 = arith.addf %arg7, %200 : vector<1x128xf32>
      scf.yield %201 : vector<1x128xf32>
    }
    %c15 = arith.constant 15 : index
    %c0_78 = arith.constant 0 : index
    %192 = vector.load %arg5[%c15, %c0_78] : memref<16x128xf32, #tpu.memory_space<vmem>>, vector<1x128xf32>
    tpu.vector_store %arg5[%c15, %c0_78], %191 {strides = array<i32>} : memref<16x128xf32, #tpu.memory_space<vmem>>, vector<1x128xf32>,
    return
  }
  func.func @transform_0(%arg0: i32) -> i32 {
    %c0_i32 = arith.constant 0 : i32
    %c0_i32_0 = arith.constant 0 : i32
    return %c0_i32 : i32
  }
  func.func @transform_1(%arg0: i32) -> i32 {
    %c0_i32 = arith.constant 0 : i32
    %c0_i32_0 = arith.constant 0 : i32
    return %c0_i32 : i32
  }
  func.func @transform_2(%arg0: i32) -> i32 {
    %c0_i32 = arith.constant 0 : i32
    %c0_i32_0 = arith.constant 0 : i32
    return %c0_i32 : i32
  }
  func.func @transform_3(%arg0: i32) -> (i32, i32) {
    %c0_i32 = arith.constant 0 : i32
    %c0_i32_0 = arith.constant 0 : i32
    %c0_i32_1 = arith.constant 0 : i32
    return %c0_i32, %c0_i32_0 : i32, i32
  }
  func.func @transform_4(%arg0: i32) -> (i32, i32) {
    %c0_i32 = arith.constant 0 : i32
    %c0_i32_0 = arith.constant 0 : i32
    return %arg0, %c0_i32 : i32, i32
  }
}

</mosaic_0001>

<llo_original>
// kernel: squeeze.19
$region0: #{squeeze.19}
  %s0 = inlined_call_operand.vmem [shape: bf16[256], index: 0, kind: input, shape index: {}]
  %s1 = inlined_call_operand.vmem [shape: bf16[8,32], index: 1, kind: output, shape index: {}]
  $region1: #{squeeze.19} parent=0
    #allocation0 [shape = 'u8[4096]{0}', space=vmem, size = 0x1000, scoped, tag = 'scoped mem for output reshape']
    #allocation1 [shape = 'u8[4096]{0}', space=vmem, size = 0x1000, scoped, tag = 'scoped mem for input reshape']
    %s3 = smul.u32 1, 2
    %s4 = sshllo.u32 0, %s3
    %s5 = sshrl.u32 %s4, 1
    %s6 = sor.u32 %s4, %s5
    %s7 = sand.u32 %s6, 85
    %s8 = sshrl.u32 %s7, 1
    %s9 = sor.u32 %s7, %s8
    %s10 = sand.u32 51, %s9
    %s11 = sshrl.u32 %s10, 2
    %s12 = sor.u32 %s10, %s11
    %s13 = sand.u32 15, %s12
    %v14 = vld [vmem:[%s0] sm:%s13]
    %v15 = vunpack.c.l.bf16 %v14
    %v16 = vunpack.c.h.bf16 %v14
    %17 = vst [vmem:[#allocation1] sm:%s4] %v15
    %v18 = vld [vmem:[#allocation1] sm:$0x3]
    %vm19 = vcmask 261120
    %20 = vst.msk [vmem:[#allocation0] ss:$4 sm:$0x3] %vm19, %v18
    %v21 = vld [vmem:[#allocation1] sm:$0x3]
    %22 = vrot.lane.b32.xlu0 %v21, 96
    %v23 = vpop.permute.xlu0 %22
    %vm24 = vcmask 261120
    %s25 = scalar_lea.vmem [#allocation0], 1
    %26 = vst.msk [vmem:[%s25] ss:$4 sm:$0x3] %vm24, %v23
    %v27 = vld [vmem:[#allocation1] sm:$0x3]
    %28 = vrot.lane.b32.xlu0 %v27, 64
    %v29 = vpop.permute.xlu0 %28
    %vm30 = vcmask 261120
    %s31 = scalar_lea.vmem [#allocation0], 2
    %32 = vst.msk [vmem:[%s31] ss:$4 sm:$0x3] %vm30, %v29
    %v33 = vld [vmem:[#allocation1] sm:$0x3]
    %34 = vrot.lane.b32.xlu0 %v33, 32
    %v35 = vpop.permute.xlu0 %34
    %vm36 = vcmask 261120
    %s37 = scalar_lea.vmem [#allocation0], 3
    %38 = vst.msk [vmem:[%s37] ss:$4 sm:$0x3] %vm36, %v35
    %s40 = smul.u32 4, 2
    %s41 = sshllo.u32 0, %s40
    %s42 = sshrl.u32 %s40, 1
    %v43 = vld [vmem:[#allocation0] sm:%s41]
    %v44 = vpack.c.bf16 0.0, %v43
    %s45 = sshllo.u32 0, %s42
    %46 = vst [vmem:[%s1] sm:%s45] %v44

// kernel: sp_merge_attention_forward.2
$region0: #{sp_merge_attention_forward.2}
  #allocation0 [shape = 'u32[]', space=smem, size = 0x4, offset = 0x4, fixed_abs, tag = 'smem constant byte address 0x4 - core index']
  #allocation1 [shape = 'u32[144,128]{1,0:T(1,128)}', space=vmem, size = 0x12000, scoped, tag = 'internal scratch']
  %s0 = inlined_call_operand.vmem [shape: f32[16,128], index: 0, kind: input, shape index: {}]
  %s1 = inlined_call_operand.vmem [shape: f32[128,128], index: 1, kind: input, shape index: {}]
  %s2 = inlined_call_operand.vmem [shape: f32[1,128], index: 2, kind: input, shape index: {}]
  %s3 = inlined_call_operand.vmem [shape: f32[16,128], index: 3, kind: output, shape index: {}]
  %s4 = sld [smem:[#allocation0]]
  $region26: #{sp_merge_attention_forward.2} parent=0
    _
  %s6 = ssub.s32 1, %s4
  %s7 = scalar_select 0, %s6, %s4
  // Predicated region
  $region2: #{sp_merge_attention_forward.2} parent=0 // pred_check
    _
  $region3: #{sp_merge_attention_forward.2} parent=0 // pred_check_branch
    %9 = sbr.rel (0) target = $region5
  $region4: #{sp_merge_attention_forward.2} parent=0 // pred_region
    _
  $region5: #{sp_merge_attention_forward.2} parent=0 // pred_fallthru
    _
  // Predicated region
  $region6: #{sp_merge_attention_forward.2} parent=0 // pred_check
    _
  $region7: #{sp_merge_attention_forward.2} parent=0 // pred_check_branch
    %11 = sbr.rel (0) target = $region9
  $region8: #{sp_merge_attention_forward.2} parent=0 // pred_region
    _
  $region9: #{sp_merge_attention_forward.2} parent=0 // pred_fallthru
    _
  // Predicated region
  $region10: #{sp_merge_attention_forward.2} parent=0 // pred_check
    _
  $region11: #{sp_merge_attention_forward.2} parent=0 // pred_check_branch
    %13 = sbr.rel (0) target = $region13
  $region12: #{sp_merge_attention_forward.2} parent=0 // pred_region
    _
  $region13: #{sp_merge_attention_forward.2} parent=0 // pred_fallthru
    _
  %p15 = scmp.eq.s32.totalorder 0, 0
  // Predicated region
  $region14: #{sp_merge_attention_forward.2} parent=0 // pred_check
    %p16 = pneg %p15
  $region15: #{sp_merge_attention_forward.2} parent=0 // pred_check_branch
    %18 = sbr.rel (%p16) target = $region17
  $region16: #{sp_merge_attention_forward.2} parent=0 // pred_region
    %v19 = vld [vmem:[%s2] sm:$0x1]
    %v21 = vlaneseq
    %v22 = vshrl.u32 %v21, 7
    %v23 = vsub.s32 0, %v22
    %v24 = vrot.slane %v19, %v23
    %26 = vst [vmem:[%s3] sm:$0xff] %v24
    %27 = vst [vmem:[%s3 + $0x8] sm:$0xff] %v24
  $region17: #{sp_merge_attention_forward.2} parent=0 // pred_fallthru
    _
  %v28 = vld [vmem:[%s3] sm:$0xff]
  %v29 = vld [vmem:[%s3 + $0x8] sm:$0xff]
  %v30 = vld [vmem:[%s0] sm:$0xff]
  %v31 = vld [vmem:[%s0 + $0x8] sm:$0xff]
  %v32 = vpack.c.bf16 %v31, %v30
  %v33 = vld [vmem:[%s1] sm:$0xff]
  %v34 = vld [vmem:[%s1 + $0x8] sm:$0xff]
  %v35 = vld [vmem:[%s1 + $0x10] sm:$0xff]
  %v36 = vld [vmem:[%s1 + $0x18] sm:$0xff]
  %v37 = vld [vmem:[%s1 + $0x20] sm:$0xff]
  %v38 = vld [vmem:[%s1 + $0x28] sm:$0xff]
  %v39 = vld [vmem:[%s1 + $0x30] sm:$0xff]
  %v40 = vld [vmem:[%s1 + $0x38] sm:$0xff]
  %v41 = vld [vmem:[%s1 + $0x40] sm:$0xff]
  %v42 = vld [vmem:[%s1 + $0x48] sm:$0xff]
  %v43 = vld [vmem:[%s1 + $0x50] sm:$0xff]
  %v44 = vld [vmem:[%s1 + $0x58] sm:$0xff]
  %v45 = vld [vmem:[%s1 + $0x60] sm:$0xff]
  %v46 = vld [vmem:[%s1 + $0x68] sm:$0xff]
  %v47 = vld [vmem:[%s1 + $0x70] sm:$0xff]
  %v48 = vld [vmem:[%s1 + $0x78] sm:$0xff]
  %v49 = vpack.c.bf16 %v34, %v33
  %v50 = vpack.c.bf16 %v36, %v35
  %v51 = vpack.c.bf16 %v38, %v37
  %v52 = vpack.c.bf16 %v40, %v39
  %v53 = vpack.c.bf16 %v42, %v41
  %v54 = vpack.c.bf16 %v44, %v43
  %v55 = vpack.c.bf16 %v46, %v45
  %v56 = vpack.c.bf16 %v48, %v47
  %57 = vmatprep.subr.bf16.mxu0 0
  %58 = vmatpush1.bf16.msra.mxu0 %v49
  %59 = vmatprep.subr.bf16.mxu0 0
  %60 = vmatpush1.bf16.msra.mxu0 %v50
  %61 = vmatprep.subr.bf16.mxu0 0
  %62 = vmatpush1.bf16.msra.mxu0 %v51
  %63 = vmatprep.subr.bf16.mxu0 0
  %64 = vmatpush1.bf16.msra.mxu0 %v52
  %65 = vmatprep.subr.bf16.mxu0 0
  %66 = vmatpush1.bf16.msra.mxu0 %v53
  %67 = vmatprep.subr.bf16.mxu0 0
  %68 = vmatpush1.bf16.msra.mxu0 %v54
  %69 = vmatprep.subr.bf16.mxu0 0
  %70 = vmatpush1.bf16.msra.mxu0 %v55
  %71 = vmatprep.subr.bf16.mxu0 0
  %72 = vmatpush1.bf16.msra.mxu0 %v56
  %73 = vmatprep.subr.bf16.mxu0 0
  %74 = vmatpush1.bf16.msra.mxu0 0
  %75 = vmatprep.subr.bf16.mxu0 0
  %76 = vmatpush1.bf16.msra.mxu0 0
  %77 = vmatprep.subr.bf16.mxu0 0
  %78 = vmatpush1.bf16.msra.mxu0 0
  %79 = vmatprep.subr.bf16.mxu0 0
  %80 = vmatpush1.bf16.msra.mxu0 0
  %81 = vmatprep.subr.bf16.mxu0 0
  %82 = vmatpush1.bf16.msra.mxu0 0
  %83 = vmatprep.subr.bf16.mxu0 0
  %84 = vmatpush1.bf16.msra.mxu0 0
  %85 = vmatprep.subr.bf16.mxu0 0
  %86 = vmatpush1.bf16.msra.mxu0 0
  %87 = vmatprep.subr.bf16.mxu0 0
  %88 = vmatpush1.bf16.msra.mxu0 0
  %89 = vmatprep.mubr.bf16.mxu0 0
  %90 = vmatmul.mubr.bf16.gmra.mrb[0].mxu0 %v32
  %v91 = vpop.f32.mrb[0].mxu0
  %v92 = vadd.f32 0.0, %v91
  %v93 = vpop.f32.mrb[0].mxu0
  %v94 = vpop.f32.mrb[0].mxu0
  %v95 = vadd.f32 0.0, %v94
  %v96 = vpop.f32.mrb[0].mxu0
  %97 = vdwg.mxu0
  %v98 = vadd.f32 %v28, %v92
  %v99 = vadd.f32 %v29, %v95
  %100 = vst [vmem:[%s3] sm:$0xff] %v98
  %101 = vst [vmem:[%s3 + $0x8] sm:$0xff] %v99
  // Predicated region
  $region18: #{sp_merge_attention_forward.2} parent=0 // pred_check
    _
  $region19: #{sp_merge_attention_forward.2} parent=0 // pred_check_branch
    %103 = sbr.rel (0) target = $region21
  $region20: #{sp_merge_attention_forward.2} parent=0 // pred_region
    _
  $region21: #{sp_merge_attention_forward.2} parent=0 // pred_fallthru
    _
  // Predicated region
  $region22: #{sp_merge_attention_forward.2} parent=0 // pred_check
    _
  $region23: #{sp_merge_attention_forward.2} parent=0 // pred_check_branch
    %105 = sbr.rel (0) target = $region25
  $region24: #{sp_merge_attention_forward.2} parent=0 // pred_region
    _
  $region25: #{sp_merge_attention_forward.2} parent=0 // pred_fallthru
    _

// kernel: sp_merge_attention_forward.3
$region0: #{sp_merge_attention_forward.3}
  #allocation0 [shape = 'u32[]', space=smem, size = 0x4, offset = 0x4, fixed_abs, tag = 'smem constant byte address 0x4 - core index']
  #allocation1 [shape = 'u32[144,128]{1,0:T(1,128)}', space=vmem, size = 0x12000, scoped, tag = 'internal scratch']
  %s0 = inlined_call_operand.vmem [shape: s32[33], index: 0, kind: input, shape index: {}]
  %s1 = inlined_call_operand.vmem [shape: s32[64], index: 1, kind: input, shape index: {}]
  %s2 = inlined_call_operand.vmem [shape: f32[64], index: 2, kind: input, shape index: {}]
  %s3 = inlined_call_operand.vmem [shape: f32[32,128], index: 3, kind: input, shape index: {}]
  %s4 = inlined_call_operand.vmem [shape: f32[32,128], index: 4, kind: output, shape index: {}]
  %s5 = sld [smem:[#allocation0]]
  $region173: #{sp_merge_attention_forward.3} parent=0
    _
  %s7 = ssub.s32 1, %s5
  %s8 = scalar_select 0, %s7, %s5
  $region1: #{sp_merge_attention_forward.3} parent=0
    #allocation2 [shape = 'u8[512]{0}', space=smem, size = 0x200, scoped, tag = 'input window, operand 0, single buffered']
    #allocation3 [shape = 's32[2]{0}', space=sflag, size = 0x8, scoped, tag = 'scoped memory for sp_merge_attention_forward.3']
    #allocation4 [shape = 'u8[512]{0}', space=smem, size = 0x200, scoped, tag = 'input window, operand 1, single buffered']
    #allocation5 [shape = 's32[1]{0}', space=sflag, size = 0x4, scoped, tag = 'scoped memory for sp_merge_attention_forward.3']
    #allocation6 [shape = 'u8[512]{0}', space=smem, size = 0x200, scoped, tag = 'input window, operand 2, single buffered']
    %9 = vsyncpa [#allocation3], 0
    %10 = vsyncpa [#allocation5], 0
    loop: start=0, step=1, limit=4
    $region2: #{sp_merge_attention_forward.3} parent=1 // loop_pre_header
      _
    $region3: #{sp_merge_attention_forward.3} parent=1 // loop_header
      %s12 = sphi 0, %s16
      %p13 = scmp.ge.s32.totalorder %s12, 4
      %s20 = sphi 0, %s20
      %s22 = sphi 0, %s20
      %s23 = sphi 0, %s22
      %s37 = sphi 0, %s23
      %s41 = sphi 0, %s41
      %s43 = sphi 0, %s41
      %s44 = sphi 0, %s43
      %s58 = sphi 0, %s44
      %s62 = sphi 0, %s62
      %s64 = sphi 0, %s62
      %s65 = sphi 0, %s64
      %s79 = sphi 0, %s65
      %s83 = sphi 0, %s83
      %s85 = sphi 0, %s83
      %s86 = sphi 0, %s85
      %s100 = sphi 0, %s86
      %s106 = sphi 0, %s108
      %s109 = sphi 0, %s106
      %s110 = sphi 0, %s109
      %s126 = sphi 0, %s110
    $region4: #{sp_merge_attention_forward.3} parent=1 // loop_header_branch
      %15 = sbr.rel (%p13) target = $region8
    $region5: #{sp_merge_attention_forward.3} parent=1 // loop_body
      %s17 = ssub.s32 %s12, 1
      %s18 = ssub.s32 %s12, 2
      %s19 = sadd.s32 %s12, 1
      %s21 = sadd.s32 %s20, 1
      %p24 = scmp.eq.s32.totalorder %s12, 1
      %p25 = scmp.ne.s32.totalorder %s20, %s22
      %p26 = scmp.eq.s32.totalorder %s12, 0
      %p27 = por %p25, %p26
      %p28 = scmp.ne.s32.totalorder %s20, %s22
      %p29 = scmp.eq.s32.totalorder %s17, 1
      %p30 = por %p28, %p29
      %p31 = scmp.ne.s32.totalorder %s22, %s23
      %p32 = scmp.eq.s32.totalorder %s17, 0
      %p33 = por %p31, %p32
      %p34 = scmp.ne.s32.totalorder %s22, %s23
      %p35 = scmp.eq.s32.totalorder %s18, 1
      %p36 = por %p34, %p35
      %p38 = scmp.ne.s32.totalorder %s23, %s37
      %p39 = scmp.eq.s32.totalorder %s18, 0
      %p40 = por %p38, %p39
      %s42 = sadd.s32 %s41, 1
      %p45 = scmp.eq.s32.totalorder %s12, 1
      %p46 = scmp.ne.s32.totalorder %s41, %s43
      %p47 = scmp.eq.s32.totalorder %s12, 0
      %p48 = por %p46, %p47
      %p49 = scmp.ne.s32.totalorder %s41, %s43
      %p50 = scmp.eq.s32.totalorder %s17, 1
      %p51 = por %p49, %p50
      %p52 = scmp.ne.s32.totalorder %s43, %s44
      %p53 = scmp.eq.s32.totalorder %s17, 0
      %p54 = por %p52, %p53
      %p55 = scmp.ne.s32.totalorder %s43, %s44
      %p56 = scmp.eq.s32.totalorder %s18, 1
      %p57 = por %p55, %p56
      %p59 = scmp.ne.s32.totalorder %s44, %s58
      %p60 = scmp.eq.s32.totalorder %s18, 0
      %p61 = por %p59, %p60
      %s63 = sadd.s32 %s62, 1
      %p66 = scmp.eq.s32.totalorder %s12, 1
      %p67 = scmp.ne.s32.totalorder %s62, %s64
      %p68 = scmp.eq.s32.totalorder %s12, 0
      %p69 = por %p67, %p68
      %p70 = scmp.ne.s32.totalorder %s62, %s64
      %p71 = scmp.eq.s32.totalorder %s17, 1
      %p72 = por %p70, %p71
      %p73 = scmp.ne.s32.totalorder %s64, %s65
      %p74 = scmp.eq.s32.totalorder %s17, 0
      %p75 = por %p73, %p74
      %p76 = scmp.ne.s32.totalorder %s64, %s65
      %p77 = scmp.eq.s32.totalorder %s18, 1
      %p78 = por %p76, %p77
      %p80 = scmp.ne.s32.totalorder %s65, %s79
      %p81 = scmp.eq.s32.totalorder %s18, 0
      %p82 = por %p80, %p81
      %s84 = sadd.s32 %s83, 1
      %p87 = scmp.eq.s32.totalorder %s12, 1
      %p88 = scmp.ne.s32.totalorder %s83, %s85
      %p89 = scmp.eq.s32.totalorder %s12, 0
      %p90 = por %p88, %p89
      %p91 = scmp.ne.s32.totalorder %s83, %s85
      %p92 = scmp.eq.s32.totalorder %s17, 1
      %p93 = por %p91, %p92
      %p94 = scmp.ne.s32.totalorder %s85, %s86
      %p95 = scmp.eq.s32.totalorder %s17, 0
      %p96 = por %p94, %p95
      %p97 = scmp.ne.s32.totalorder %s85, %s86
      %p98 = scmp.eq.s32.totalorder %s18, 1
      %p99 = por %p97, %p98
      %p101 = scmp.ne.s32.totalorder %s86, %s100
      %p102 = scmp.eq.s32.totalorder %s18, 0
      %p103 = por %p101, %p102
      %s104 = ssub.s32 %s12, %s19
      %p105 = scmp.eq.s32.totalorder %s104, 0
      %s107 = sadd.s32 %s106, 1
      %s108 = scalar_select %p105, %s106, %s107
      %p111 = pneg %p105
      %p112 = scmp.eq.s32.totalorder %s12, 1
      %p113 = por %p111, %p112
      %p114 = scmp.ne.s32.totalorder %s106, %s109
      %p115 = scmp.eq.s32.totalorder %s12, 0
      %p116 = por %p114, %p115
      %p117 = scmp.ne.s32.totalorder %s106, %s109
      %p118 = scmp.eq.s32.totalorder %s17, 1
      %p119 = por %p117, %p118
      %p120 = scmp.ne.s32.totalorder %s109, %s110
      %p121 = scmp.eq.s32.totalorder %s17, 0
      %p122 = por %p120, %p121
      %p123 = scmp.ne.s32.totalorder %s109, %s110
      %p124 = scmp.eq.s32.totalorder %s18, 1
      %p125 = por %p123, %p124
      %p127 = scmp.ne.s32.totalorder %s110, %s126
      %p128 = scmp.eq.s32.totalorder %s18, 0
      %p129 = por %p127, %p128
      %p130 = scmp.le.s32.totalorder 1, %s12
      %p131 = scmp.lt.s32.totalorder %s12, 3
      %p132 = pnand %p130, %p131
      %p133 = pneg %p132
      // Predicated region
      $region9: #{sp_merge_attention_forward.3} parent=5 // pred_check
        _
      $region10: #{sp_merge_attention_forward.3} parent=5 // pred_check_branch
        %135 = sbr.rel (%p132) target = $region12
      $region11: #{sp_merge_attention_forward.3} parent=5 // pred_region
        %s136 = ssub.s32 %s12, 1
        // Predicated region
        $region13: #{sp_merge_attention_forward.3} parent=11 // pred_check
          %p137 = pneg %p33
        $region14: #{sp_merge_attention_forward.3} parent=11 // pred_check_branch
          %139 = sbr.rel (%p137) target = $region16
        $region15: #{sp_merge_attention_forward.3} parent=11 // pred_region
          %s141 = ssub.s32 16, 16
          %142 = vsyncadd [#allocation3], %s141
          %s144 = sshll.u32 %s0, 4
          %s145 = int_to_ptr.vmem [resolvable:$true] %s144
          %147 = dma.vmem_to_smem %s145, 16, [#allocation2], [#allocation3]
        $region16: #{sp_merge_attention_forward.3} parent=11 // pred_fallthru
          _
        // Predicated region
        $region17: #{sp_merge_attention_forward.3} parent=11 // pred_check
          %p148 = pneg %p54
        $region18: #{sp_merge_attention_forward.3} parent=11 // pred_check_branch
          %150 = sbr.rel (%p148) target = $region20
        $region19: #{sp_merge_attention_forward.3} parent=11 // pred_region
          %s152 = ssub.s32 16, 16
          %153 = vsyncadd [#allocation5], %s152
          %s155 = sshll.u32 %s1, 4
          %s156 = int_to_ptr.vmem [resolvable:$true] %s155
          %158 = dma.vmem_to_smem %s156, 16, [#allocation4], [#allocation5]
        $region20: #{sp_merge_attention_forward.3} parent=11 // pred_fallthru
          _
        // Predicated region
        $region21: #{sp_merge_attention_forward.3} parent=11 // pred_check
          %p159 = pneg %p75
        $region22: #{sp_merge_attention_forward.3} parent=11 // pred_check_branch
          %161 = sbr.rel (%p159) target = $region24
        $region23: #{sp_merge_attention_forward.3} parent=11 // pred_region
          %s163 = ssub.s32 16, 16
          %164 = vsyncadd [#allocation5], %s163
          %s166 = sshll.u32 %s2, 4
          %s167 = int_to_ptr.vmem [resolvable:$true] %s166
          %169 = dma.vmem_to_smem %s167, 16, [#allocation6], [#allocation5]
        $region24: #{sp_merge_attention_forward.3} parent=11 // pred_fallthru
          _
        // Predicated region
        $region25: #{sp_merge_attention_forward.3} parent=11 // pred_check
          %p170 = pneg %p96
        $region26: #{sp_merge_attention_forward.3} parent=11 // pred_check_branch
          %172 = sbr.rel (%p170) target = $region28
        $region27: #{sp_merge_attention_forward.3} parent=11 // pred_region
          _
        $region28: #{sp_merge_attention_forward.3} parent=11 // pred_fallthru
          _
      $region12: #{sp_merge_attention_forward.3} parent=5 // pred_fallthru
        _
      %p173 = scmp.lt.s32.totalorder %s12, 2
      // Predicated region
      $region29: #{sp_merge_attention_forward.3} parent=5 // pred_check
        %p174 = pneg %p173
      $region30: #{sp_merge_attention_forward.3} parent=5 // pred_check_branch
        %176 = sbr.rel (%p174) target = $region32
      $region31: #{sp_merge_attention_forward.3} parent=5 // pred_region
        _
      $region32: #{sp_merge_attention_forward.3} parent=5 // pred_fallthru
        _
      %p177 = scmp.le.s32.totalorder 1, %s12
      %p178 = scmp.lt.s32.totalorder %s12, 3
      %p179 = pnand %p177, %p178
      %p180 = pneg %p179
      // Predicated region
      $region33: #{sp_merge_attention_forward.3} parent=5 // pred_check
        _
      $region34: #{sp_merge_attention_forward.3} parent=5 // pred_check_branch
        %182 = sbr.rel (%p179) target = $region36
      $region35: #{sp_merge_attention_forward.3} parent=5 // pred_region
        %s183 = ssub.s32 %s12, 1
        // Predicated region
        $region37: #{sp_merge_attention_forward.3} parent=35 // pred_check
          %p184 = pneg %p33
        $region38: #{sp_merge_attention_forward.3} parent=35 // pred_check_branch
          %186 = sbr.rel (%p184) target = $region40
        $region39: #{sp_merge_attention_forward.3} parent=35 // pred_region
          %187 = dma.done [#allocation3], 16
        $region40: #{sp_merge_attention_forward.3} parent=35 // pred_fallthru
          _
        // Predicated region
        $region41: #{sp_merge_attention_forward.3} parent=35 // pred_check
          %p188 = pneg %p54
        $region42: #{sp_merge_attention_forward.3} parent=35 // pred_check_branch
          %190 = sbr.rel (%p188) target = $region44
        $region43: #{sp_merge_attention_forward.3} parent=35 // pred_region
          %191 = dma.done [#allocation5], 16
        $region44: #{sp_merge_attention_forward.3} parent=35 // pred_fallthru
          _
        // Predicated region
        $region45: #{sp_merge_attention_forward.3} parent=35 // pred_check
          %p192 = pneg %p75
        $region46: #{sp_merge_attention_forward.3} parent=35 // pred_check_branch
          %194 = sbr.rel (%p192) target = $region48
        $region47: #{sp_merge_attention_forward.3} parent=35 // pred_region
          %195 = dma.done [#allocation5], 16
        $region48: #{sp_merge_attention_forward.3} parent=35 // pred_fallthru
          _
        %196 = sfence
        %p197 = pneg %p33
        %p198 = pneg %p30
        %p199 = pneg %p54
        %p200 = pneg %p51
        %p201 = pneg %p75
        %p202 = pneg %p72
        %p203 = pneg %p96
        %p204 = pneg %p93
        %p205 = pneg %p122
        %p206 = pneg %p119
        %s207 = smul.u32 2, %s17
        %p208 = scmp.lt.s32.totalorder %s207, 3
        %s209 = scalar_select %p208, %s207, 3
        %s210 = smul.addr %s209, 8
        %s211 = scalar_lea.vmem %s4, %s210
        %s212 = smul.u32 2, %s17
        %p213 = scmp.lt.s32.totalorder %s212, 3
        %s214 = scalar_select %p213, %s212, 3
        %s215 = smul.addr %s214, 8
        %s216 = scalar_lea.vmem %s4, %s215
        %s217 = smul.u32 2, %s17
        %s218 = smul.u32 %s17, 16
        %s219 = sld [smem:[#allocation2 + %s218]]
        %s220 = sadd.s32 %s218, 1
        %s221 = sld [smem:[#allocation2 + %s220]]
        // While loop
        $region49: #{sp_merge_attention_forward.3} parent=35 // loop_pre_header
          _
        $region50: #{sp_merge_attention_forward.3} parent=35 // loop_header
          %s223 = sphi %s219, %s225
          %p224 = scmp.ge.s32.totalorder %s223, %s221
          %v228 = vphi 0.0, %v235
        $region51: #{sp_merge_attention_forward.3} parent=35 // loop_header_branch
          %227 = sbr.rel (%p224) target = $region55
        $region52: #{sp_merge_attention_forward.3} parent=35 // loop_body
          %s229 = sld [smem:[#allocation6 + %s223]]
          %s230 = sld [smem:[#allocation4 + %s223]]
          %s231 = scalar_lea.vmem %s3, %s230
          %v232 = vld [vmem:[%s231] sm:$0x1]
          %v233 = vstv %s229
          %v234 = vmul.f32 %v233, %v232
          %v235 = vadd.f32 %v228, %v234
        $region53: #{sp_merge_attention_forward.3} parent=35 // loop_footer
          %s225 = sadd.s32 %s223, 1
        $region54: #{sp_merge_attention_forward.3} parent=35 // loop_footer_branch
          %222 = sbr.rel target = $region50
        $region55: #{sp_merge_attention_forward.3} parent=35 // loop_exit
          _
        %236 = vst [vmem:[%s216] sm:$0x1] %v228
        %s237 = sld [smem:[#allocation2 + %s220]]
        %s238 = sadd.s32 %s218, 2
        %s239 = sld [smem:[#allocation2 + %s238]]
        // While loop
        $region56: #{sp_merge_attention_forward.3} parent=35 // loop_pre_header
          _
        $region57: #{sp_merge_attention_forward.3} parent=35 // loop_header
          %s241 = sphi %s237, %s243
          %p242 = scmp.ge.s32.totalorder %s241, %s239
          %v246 = vphi 0.0, %v253
        $region58: #{sp_merge_attention_forward.3} parent=35 // loop_header_branch
          %245 = sbr.rel (%p242) target = $region62
        $region59: #{sp_merge_attention_forward.3} parent=35 // loop_body
          %s247 = sld [smem:[#allocation6 + %s241]]
          %s248 = sld [smem:[#allocation4 + %s241]]
          %s249 = scalar_lea.vmem %s3, %s248
          %v250 = vld [vmem:[%s249] sm:$0x1]
          %v251 = vstv %s247
          %v252 = vmul.f32 %v251, %v250
          %v253 = vadd.f32 %v246, %v252
        $region60: #{sp_merge_attention_forward.3} parent=35 // loop_footer
          %s243 = sadd.s32 %s241, 1
        $region61: #{sp_merge_attention_forward.3} parent=35 // loop_footer_branch
          %240 = sbr.rel target = $region57
        $region62: #{sp_merge_attention_forward.3} parent=35 // loop_exit
          _
        %254 = vst [vmem:[%s216 + $0x1] sm:$0x1] %v246
        %s255 = sld [smem:[#allocation2 + %s238]]
        %s256 = sadd.s32 %s218, 3
        %s257 = sld [smem:[#allocation2 + %s256]]
        // While loop
        $region63: #{sp_merge_attention_forward.3} parent=35 // loop_pre_header
          _
        $region64: #{sp_merge_attention_forward.3} parent=35 // loop_header
          %s259 = sphi %s255, %s261
          %p260 = scmp.ge.s32.totalorder %s259, %s257
          %v264 = vphi 0.0, %v271
        $region65: #{sp_merge_attention_forward.3} parent=35 // loop_header_branch
          %263 = sbr.rel (%p260) target = $region69
        $region66: #{sp_merge_attention_forward.3} parent=35 // loop_body
          %s265 = sld [smem:[#allocation6 + %s259]]
          %s266 = sld [smem:[#allocation4 + %s259]]
          %s267 = scalar_lea.vmem %s3, %s266
          %v268 = vld [vmem:[%s267] sm:$0x1]
          %v269 = vstv %s265
          %v270 = vmul.f32 %v269, %v268
          %v271 = vadd.f32 %v264, %v270
        $region67: #{sp_merge_attention_forward.3} parent=35 // loop_footer
          %s261 = sadd.s32 %s259, 1
        $region68: #{sp_merge_attention_forward.3} parent=35 // loop_footer_branch
          %258 = sbr.rel target = $region64
        $region69: #{sp_merge_attention_forward.3} parent=35 // loop_exit
          _
        %272 = vst [vmem:[%s216 + $0x2] sm:$0x1] %v264
        %s273 = sld [smem:[#allocation2 + %s256]]
        %s274 = sadd.s32 %s218, 4
        %s275 = sld [smem:[#allocation2 + %s274]]
        // While loop
        $region70: #{sp_merge_attention_forward.3} parent=35 // loop_pre_header
          _
        $region71: #{sp_merge_attention_forward.3} parent=35 // loop_header
          %s277 = sphi %s273, %s279
          %p278 = scmp.ge.s32.totalorder %s277, %s275
          %v282 = vphi 0.0, %v289
        $region72: #{sp_merge_attention_forward.3} parent=35 // loop_header_branch
          %281 = sbr.rel (%p278) target = $region76
        $region73: #{sp_merge_attention_forward.3} parent=35 // loop_body
          %s283 = sld [smem:[#allocation6 + %s277]]
          %s284 = sld [smem:[#allocation4 + %s277]]
          %s285 = scalar_lea.vmem %s3, %s284
          %v286 = vld [vmem:[%s285] sm:$0x1]
          %v287 = vstv %s283
          %v288 = vmul.f32 %v287, %v286
          %v289 = vadd.f32 %v282, %v288
        $region74: #{sp_merge_attention_forward.3} parent=35 // loop_footer
          %s279 = sadd.s32 %s277, 1
        $region75: #{sp_merge_attention_forward.3} parent=35 // loop_footer_branch
          %276 = sbr.rel target = $region71
        $region76: #{sp_merge_attention_forward.3} parent=35 // loop_exit
          _
        %290 = vst [vmem:[%s216 + $0x3] sm:$0x1] %v282
        %s291 = sld [smem:[#allocation2 + %s274]]
        %s292 = sadd.s32 %s218, 5
        %s293 = sld [smem:[#allocation2 + %s292]]
        // While loop
        $region77: #{sp_merge_attention_forward.3} parent=35 // loop_pre_header
          _
        $region78: #{sp_merge_attention_forward.3} parent=35 // loop_header
          %s295 = sphi %s291, %s297
          %p296 = scmp.ge.s32.totalorder %s295, %s293
          %v300 = vphi 0.0, %v307
        $region79: #{sp_merge_attention_forward.3} parent=35 // loop_header_branch
          %299 = sbr.rel (%p296) target = $region83
        $region80: #{sp_merge_attention_forward.3} parent=35 // loop_body
          %s301 = sld [smem:[#allocation6 + %s295]]
          %s302 = sld [smem:[#allocation4 + %s295]]
          %s303 = scalar_lea.vmem %s3, %s302
          %v304 = vld [vmem:[%s303] sm:$0x1]
          %v305 = vstv %s301
          %v306 = vmul.f32 %v305, %v304
          %v307 = vadd.f32 %v300, %v306
        $region81: #{sp_merge_attention_forward.3} parent=35 // loop_footer
          %s297 = sadd.s32 %s295, 1
        $region82: #{sp_merge_attention_forward.3} parent=35 // loop_footer_branch
          %294 = sbr.rel target = $region78
        $region83: #{sp_merge_attention_forward.3} parent=35 // loop_exit
          _
        %308 = vst [vmem:[%s216 + $0x4] sm:$0x1] %v300
        %s309 = sld [smem:[#allocation2 + %s292]]
        %s310 = sadd.s32 %s218, 6
        %s311 = sld [smem:[#allocation2 + %s310]]
        // While loop
        $region84: #{sp_merge_attention_forward.3} parent=35 // loop_pre_header
          _
        $region85: #{sp_merge_attention_forward.3} parent=35 // loop_header
          %s313 = sphi %s309, %s315
          %p314 = scmp.ge.s32.totalorder %s313, %s311
          %v318 = vphi 0.0, %v325
        $region86: #{sp_merge_attention_forward.3} parent=35 // loop_header_branch
          %317 = sbr.rel (%p314) target = $region90
        $region87: #{sp_merge_attention_forward.3} parent=35 // loop_body
          %s319 = sld [smem:[#allocation6 + %s313]]
          %s320 = sld [smem:[#allocation4 + %s313]]
          %s321 = scalar_lea.vmem %s3, %s320
          %v322 = vld [vmem:[%s321] sm:$0x1]
          %v323 = vstv %s319
          %v324 = vmul.f32 %v323, %v322
          %v325 = vadd.f32 %v318, %v324
        $region88: #{sp_merge_attention_forward.3} parent=35 // loop_footer
          %s315 = sadd.s32 %s313, 1
        $region89: #{sp_merge_attention_forward.3} parent=35 // loop_footer_branch
          %312 = sbr.rel target = $region85
        $region90: #{sp_merge_attention_forward.3} parent=35 // loop_exit
          _
        %326 = vst [vmem:[%s216 + $0x5] sm:$0x1] %v318
        %s327 = sld [smem:[#allocation2 + %s310]]
        %s328 = sadd.s32 %s218, 7
        %s329 = sld [smem:[#allocation2 + %s328]]
        // While loop
        $region91: #{sp_merge_attention_forward.3} parent=35 // loop_pre_header
          _
        $region92: #{sp_merge_attention_forward.3} parent=35 // loop_header
          %s331 = sphi %s327, %s333
          %p332 = scmp.ge.s32.totalorder %s331, %s329
          %v336 = vphi 0.0, %v343
        $region93: #{sp_merge_attention_forward.3} parent=35 // loop_header_branch
          %335 = sbr.rel (%p332) target = $region97
        $region94: #{sp_merge_attention_forward.3} parent=35 // loop_body
          %s337 = sld [smem:[#allocation6 + %s331]]
          %s338 = sld [smem:[#allocation4 + %s331]]
          %s339 = scalar_lea.vmem %s3, %s338
          %v340 = vld [vmem:[%s339] sm:$0x1]
          %v341 = vstv %s337
          %v342 = vmul.f32 %v341, %v340
          %v343 = vadd.f32 %v336, %v342
        $region95: #{sp_merge_attention_forward.3} parent=35 // loop_footer
          %s333 = sadd.s32 %s331, 1
        $region96: #{sp_merge_attention_forward.3} parent=35 // loop_footer_branch
          %330 = sbr.rel target = $region92
        $region97: #{sp_merge_attention_forward.3} parent=35 // loop_exit
          _
        %344 = vst [vmem:[%s216 + $0x6] sm:$0x1] %v336
        %s345 = sld [smem:[#allocation2 + %s328]]
        %s346 = sadd.s32 %s218, 8
        %s347 = sld [smem:[#allocation2 + %s346]]
        // While loop
        $region98: #{sp_merge_attention_forward.3} parent=35 // loop_pre_header
          _
        $region99: #{sp_merge_attention_forward.3} parent=35 // loop_header
          %s349 = sphi %s345, %s351
          %p350 = scmp.ge.s32.totalorder %s349, %s347
          %v354 = vphi 0.0, %v361
        $region100: #{sp_merge_attention_forward.3} parent=35 // loop_header_branch
          %353 = sbr.rel (%p350) target = $region104
        $region101: #{sp_merge_attention_forward.3} parent=35 // loop_body
          %s355 = sld [smem:[#allocation6 + %s349]]
          %s356 = sld [smem:[#allocation4 + %s349]]
          %s357 = scalar_lea.vmem %s3, %s356
          %v358 = vld [vmem:[%s357] sm:$0x1]
          %v359 = vstv %s355
          %v360 = vmul.f32 %v359, %v358
          %v361 = vadd.f32 %v354, %v360
        $region102: #{sp_merge_attention_forward.3} parent=35 // loop_footer
          %s351 = sadd.s32 %s349, 1
        $region103: #{sp_merge_attention_forward.3} parent=35 // loop_footer_branch
          %348 = sbr.rel target = $region99
        $region104: #{sp_merge_attention_forward.3} parent=35 // loop_exit
          _
        %362 = vst [vmem:[%s216 + $0x7] sm:$0x1] %v354
        %s363 = sld [smem:[#allocation2 + %s346]]
        %s364 = sadd.s32 %s218, 9
        %s365 = sld [smem:[#allocation2 + %s364]]
        // While loop
        $region105: #{sp_merge_attention_forward.3} parent=35 // loop_pre_header
          _
        $region106: #{sp_merge_attention_forward.3} parent=35 // loop_header
          %s367 = sphi %s363, %s369
          %p368 = scmp.ge.s32.totalorder %s367, %s365
          %v372 = vphi 0.0, %v379
        $region107: #{sp_merge_attention_forward.3} parent=35 // loop_header_branch
          %371 = sbr.rel (%p368) target = $region111
        $region108: #{sp_merge_attention_forward.3} parent=35 // loop_body
          %s373 = sld [smem:[#allocation6 + %s367]]
          %s374 = sld [smem:[#allocation4 + %s367]]
          %s375 = scalar_lea.vmem %s3, %s374
          %v376 = vld [vmem:[%s375] sm:$0x1]
          %v377 = vstv %s373
          %v378 = vmul.f32 %v377, %v376
          %v379 = vadd.f32 %v372, %v378
        $region109: #{sp_merge_attention_forward.3} parent=35 // loop_footer
          %s369 = sadd.s32 %s367, 1
        $region110: #{sp_merge_attention_forward.3} parent=35 // loop_footer_branch
          %366 = sbr.rel target = $region106
        $region111: #{sp_merge_attention_forward.3} parent=35 // loop_exit
          _
        %380 = vst [vmem:[%s216 + $0x8] sm:$0x1] %v372
        %s381 = sld [smem:[#allocation2 + %s364]]
        %s382 = sadd.s32 %s218, 10
        %s383 = sld [smem:[#allocation2 + %s382]]
        // While loop
        $region112: #{sp_merge_attention_forward.3} parent=35 // loop_pre_header
          _
        $region113: #{sp_merge_attention_forward.3} parent=35 // loop_header
          %s385 = sphi %s381, %s387
          %p386 = scmp.ge.s32.totalorder %s385, %s383
          %v390 = vphi 0.0, %v397
        $region114: #{sp_merge_attention_forward.3} parent=35 // loop_header_branch
          %389 = sbr.rel (%p386) target = $region118
        $region115: #{sp_merge_attention_forward.3} parent=35 // loop_body
          %s391 = sld [smem:[#allocation6 + %s385]]
          %s392 = sld [smem:[#allocation4 + %s385]]
          %s393 = scalar_lea.vmem %s3, %s392
          %v394 = vld [vmem:[%s393] sm:$0x1]
          %v395 = vstv %s391
          %v396 = vmul.f32 %v395, %v394
          %v397 = vadd.f32 %v390, %v396
        $region116: #{sp_merge_attention_forward.3} parent=35 // loop_footer
          %s387 = sadd.s32 %s385, 1
        $region117: #{sp_merge_attention_forward.3} parent=35 // loop_footer_branch
          %384 = sbr.rel target = $region113
        $region118: #{sp_merge_attention_forward.3} parent=35 // loop_exit
          _
        %398 = vst [vmem:[%s216 + $0x9] sm:$0x1] %v390
        %s399 = sld [smem:[#allocation2 + %s382]]
        %s400 = sadd.s32 %s218, 11
        %s401 = sld [smem:[#allocation2 + %s400]]
        // While loop
        $region119: #{sp_merge_attention_forward.3} parent=35 // loop_pre_header
          _
        $region120: #{sp_merge_attention_forward.3} parent=35 // loop_header
          %s403 = sphi %s399, %s405
          %p404 = scmp.ge.s32.totalorder %s403, %s401
          %v408 = vphi 0.0, %v415
        $region121: #{sp_merge_attention_forward.3} parent=35 // loop_header_branch
          %407 = sbr.rel (%p404) target = $region125
        $region122: #{sp_merge_attention_forward.3} parent=35 // loop_body
          %s409 = sld [smem:[#allocation6 + %s403]]
          %s410 = sld [smem:[#allocation4 + %s403]]
          %s411 = scalar_lea.vmem %s3, %s410
          %v412 = vld [vmem:[%s411] sm:$0x1]
          %v413 = vstv %s409
          %v414 = vmul.f32 %v413, %v412
          %v415 = vadd.f32 %v408, %v414
        $region123: #{sp_merge_attention_forward.3} parent=35 // loop_footer
          %s405 = sadd.s32 %s403, 1
        $region124: #{sp_merge_attention_forward.3} parent=35 // loop_footer_branch
          %402 = sbr.rel target = $region120
        $region125: #{sp_merge_attention_forward.3} parent=35 // loop_exit
          _
        %416 = vst [vmem:[%s216 + $0xa] sm:$0x1] %v408
        %s417 = sld [smem:[#allocation2 + %s400]]
        %s418 = sadd.s32 %s218, 12
        %s419 = sld [smem:[#allocation2 + %s418]]
        // While loop
        $region126: #{sp_merge_attention_forward.3} parent=35 // loop_pre_header
          _
        $region127: #{sp_merge_attention_forward.3} parent=35 // loop_header
          %s421 = sphi %s417, %s423
          %p422 = scmp.ge.s32.totalorder %s421, %s419
          %v426 = vphi 0.0, %v433
        $region128: #{sp_merge_attention_forward.3} parent=35 // loop_header_branch
          %425 = sbr.rel (%p422) target = $region132
        $region129: #{sp_merge_attention_forward.3} parent=35 // loop_body
          %s427 = sld [smem:[#allocation6 + %s421]]
          %s428 = sld [smem:[#allocation4 + %s421]]
          %s429 = scalar_lea.vmem %s3, %s428
          %v430 = vld [vmem:[%s429] sm:$0x1]
          %v431 = vstv %s427
          %v432 = vmul.f32 %v431, %v430
          %v433 = vadd.f32 %v426, %v432
        $region130: #{sp_merge_attention_forward.3} parent=35 // loop_footer
          %s423 = sadd.s32 %s421, 1
        $region131: #{sp_merge_attention_forward.3} parent=35 // loop_footer_branch
          %420 = sbr.rel target = $region127
        $region132: #{sp_merge_attention_forward.3} parent=35 // loop_exit
          _
        %434 = vst [vmem:[%s216 + $0xb] sm:$0x1] %v426
        %s435 = sld [smem:[#allocation2 + %s418]]
        %s436 = sadd.s32 %s218, 13
        %s437 = sld [smem:[#allocation2 + %s436]]
        // While loop
        $region133: #{sp_merge_attention_forward.3} parent=35 // loop_pre_header
          _
        $region134: #{sp_merge_attention_forward.3} parent=35 // loop_header
          %s439 = sphi %s435, %s441
          %p440 = scmp.ge.s32.totalorder %s439, %s437
          %v444 = vphi 0.0, %v451
        $region135: #{sp_merge_attention_forward.3} parent=35 // loop_header_branch
          %443 = sbr.rel (%p440) target = $region139
        $region136: #{sp_merge_attention_forward.3} parent=35 // loop_body
          %s445 = sld [smem:[#allocation6 + %s439]]
          %s446 = sld [smem:[#allocation4 + %s439]]
          %s447 = scalar_lea.vmem %s3, %s446
          %v448 = vld [vmem:[%s447] sm:$0x1]
          %v449 = vstv %s445
          %v450 = vmul.f32 %v449, %v448
          %v451 = vadd.f32 %v444, %v450
        $region137: #{sp_merge_attention_forward.3} parent=35 // loop_footer
          %s441 = sadd.s32 %s439, 1
        $region138: #{sp_merge_attention_forward.3} parent=35 // loop_footer_branch
          %438 = sbr.rel target = $region134
        $region139: #{sp_merge_attention_forward.3} parent=35 // loop_exit
          _
        %452 = vst [vmem:[%s216 + $0xc] sm:$0x1] %v444
        %s453 = sld [smem:[#allocation2 + %s436]]
        %s454 = sadd.s32 %s218, 14
        %s455 = sld [smem:[#allocation2 + %s454]]
        // While loop
        $region140: #{sp_merge_attention_forward.3} parent=35 // loop_pre_header
          _
        $region141: #{sp_merge_attention_forward.3} parent=35 // loop_header
          %s457 = sphi %s453, %s459
          %p458 = scmp.ge.s32.totalorder %s457, %s455
          %v462 = vphi 0.0, %v469
        $region142: #{sp_merge_attention_forward.3} parent=35 // loop_header_branch
          %461 = sbr.rel (%p458) target = $region146
        $region143: #{sp_merge_attention_forward.3} parent=35 // loop_body
          %s463 = sld [smem:[#allocation6 + %s457]]
          %s464 = sld [smem:[#allocation4 + %s457]]
          %s465 = scalar_lea.vmem %s3, %s464
          %v466 = vld [vmem:[%s465] sm:$0x1]
          %v467 = vstv %s463
          %v468 = vmul.f32 %v467, %v466
          %v469 = vadd.f32 %v462, %v468
        $region144: #{sp_merge_attention_forward.3} parent=35 // loop_footer
          %s459 = sadd.s32 %s457, 1
        $region145: #{sp_merge_attention_forward.3} parent=35 // loop_footer_branch
          %456 = sbr.rel target = $region141
        $region146: #{sp_merge_attention_forward.3} parent=35 // loop_exit
          _
        %470 = vst [vmem:[%s216 + $0xd] sm:$0x1] %v462
        %s471 = sld [smem:[#allocation2 + %s454]]
        %s472 = sadd.s32 %s218, 15
        %s473 = sld [smem:[#allocation2 + %s472]]
        // While loop
        $region147: #{sp_merge_attention_forward.3} parent=35 // loop_pre_header
          _
        $region148: #{sp_merge_attention_forward.3} parent=35 // loop_header
          %s475 = sphi %s471, %s477
          %p476 = scmp.ge.s32.totalorder %s475, %s473
          %v480 = vphi 0.0, %v487
        $region149: #{sp_merge_attention_forward.3} parent=35 // loop_header_branch
          %479 = sbr.rel (%p476) target = $region153
        $region150: #{sp_merge_attention_forward.3} parent=35 // loop_body
          %s481 = sld [smem:[#allocation6 + %s475]]
          %s482 = sld [smem:[#allocation4 + %s475]]
          %s483 = scalar_lea.vmem %s3, %s482
          %v484 = vld [vmem:[%s483] sm:$0x1]
          %v485 = vstv %s481
          %v486 = vmul.f32 %v485, %v484
          %v487 = vadd.f32 %v480, %v486
        $region151: #{sp_merge_attention_forward.3} parent=35 // loop_footer
          %s477 = sadd.s32 %s475, 1
        $region152: #{sp_merge_attention_forward.3} parent=35 // loop_footer_branch
          %474 = sbr.rel target = $region148
        $region153: #{sp_merge_attention_forward.3} parent=35 // loop_exit
          _
        %488 = vst [vmem:[%s216 + $0xe] sm:$0x1] %v480
        %s489 = sld [smem:[#allocation2 + %s472]]
        %s490 = sadd.s32 %s218, 16
        %s491 = sld [smem:[#allocation2 + %s490]]
        // While loop
        $region154: #{sp_merge_attention_forward.3} parent=35 // loop_pre_header
          _
        $region155: #{sp_merge_attention_forward.3} parent=35 // loop_header
          %s493 = sphi %s489, %s495
          %p494 = scmp.ge.s32.totalorder %s493, %s491
          %v498 = vphi 0.0, %v505
        $region156: #{sp_merge_attention_forward.3} parent=35 // loop_header_branch
          %497 = sbr.rel (%p494) target = $region160
        $region157: #{sp_merge_attention_forward.3} parent=35 // loop_body
          %s499 = sld [smem:[#allocation6 + %s493]]
          %s500 = sld [smem:[#allocation4 + %s493]]
          %s501 = scalar_lea.vmem %s3, %s500
          %v502 = vld [vmem:[%s501] sm:$0x1]
          %v503 = vstv %s499
          %v504 = vmul.f32 %v503, %v502
          %v505 = vadd.f32 %v498, %v504
        $region158: #{sp_merge_attention_forward.3} parent=35 // loop_footer
          %s495 = sadd.s32 %s493, 1
        $region159: #{sp_merge_attention_forward.3} parent=35 // loop_footer_branch
          %492 = sbr.rel target = $region155
        $region160: #{sp_merge_attention_forward.3} parent=35 // loop_exit
          _
        %506 = vst [vmem:[%s216 + $0xf] sm:$0x1] %v498
        %s507 = smul.u32 2, %s17
        %p508 = scmp.lt.s32.totalorder %s507, 3
        %s509 = scalar_select %p508, %s507, 3
        %s510 = smul.addr %s509, 8
        %s511 = scalar_lea.vmem %s4, %s510
        // Predicated region
        $region161: #{sp_merge_attention_forward.3} parent=35 // pred_check
          %p512 = pneg %p119
        $region162: #{sp_merge_attention_forward.3} parent=35 // pred_check_branch
          %514 = sbr.rel (%p512) target = $region164
        $region163: #{sp_merge_attention_forward.3} parent=35 // pred_region
          %s515 = smul.u32 2, %s17
        $region164: #{sp_merge_attention_forward.3} parent=35 // pred_fallthru
          _
      $region36: #{sp_merge_attention_forward.3} parent=5 // pred_fallthru
        _
      %p516 = scmp.le.s32.totalorder 2, %s12
      // Predicated region
      $region165: #{sp_merge_attention_forward.3} parent=5 // pred_check
        %p517 = pneg %p516
      $region166: #{sp_merge_attention_forward.3} parent=5 // pred_check_branch
        %519 = sbr.rel (%p517) target = $region168
      $region167: #{sp_merge_attention_forward.3} parent=5 // pred_region
        %s520 = ssub.s32 %s12, 2
        // Predicated region
        $region169: #{sp_merge_attention_forward.3} parent=167 // pred_check
          %p521 = pneg %p125
        $region170: #{sp_merge_attention_forward.3} parent=167 // pred_check_branch
          %523 = sbr.rel (%p521) target = $region172
        $region171: #{sp_merge_attention_forward.3} parent=167 // pred_region
          %s524 = smul.u32 2, %s18
          %p525 = scmp.lt.s32.totalorder %s524, 3
          %s526 = scalar_select %p525, %s524, 3
          %s527 = smul.addr %s526, 8
          %s528 = scalar_lea.vmem %s4, %s527
        $region172: #{sp_merge_attention_forward.3} parent=167 // pred_fallthru
          _
      $region168: #{sp_merge_attention_forward.3} parent=5 // pred_fallthru
        _
    $region6: #{sp_merge_attention_forward.3} parent=1 // loop_footer
      %s16 = sadd.s32 1, %s12
    $region7: #{sp_merge_attention_forward.3} parent=1 // loop_footer_branch
      %11 = sbr.rel target = $region3
    $region8: #{sp_merge_attention_forward.3} parent=1 // loop_exit
      _
    %529 = vsyncpa [#allocation3], 1
    %s530 = scalar_lea.sflag [#allocation3], 1
    %531 = vsyncpa %s530, 1
    %532 = vsyncpa [#allocation5], 1

</llo_original>
